<compile_context>
chip_gen: v6e
topology: v6e:2x2x1
jax: 0.10.0
libtpu: 0.0.40
codegen_flags: <defaults>
</compile_context>

<pallas_src>
import functools
import numpy as np
import jax
import jax.numpy as jnp
from jax import lax
from jax.experimental import pallas as pl
from jax.experimental.pallas import tpu as pltpu

TEMPERATURE = 0.1
BASE_TEMPERATURE = 0.07
IGNORE_LABEL = -1
MAX_SAMPLES = 1024
MAX_VIEWS = 100

PAD_LABEL = -2          # sentinel for padded rows: never equals a real class id or IGNORE_LABEL


def _device_kind() -> str:
    try:
        return jax.devices()[0].device_kind.lower()
    except Exception:
        return ""


def _pick_row_tile(n_rows: int) -> int:
    """256-row anchor tiles everywhere; 512 on v7x (one grid step per TensorCore). Never tile
    past the 128-padded problem size (avoids pure-padding work)."""
    kind = _device_kind()
    tile = 512 if "v7" in kind else 256
    n_min = int(pl.cdiv(max(n_rows, 1), 128)) * 128
    while tile > 128 and tile > n_min:
        tile //= 2
    return tile


def _use_bf16_transcendentals() -> bool:
    """bf16 EUP exists on v6e/v7x; keep f32 exp/log on older chips (v5e etc.)."""
    kind = _device_kind()
    return ("v6" in kind) or ("v7" in kind)


# ----------------------------------------------------------------------------
# Pallas kernel: row-tiled contrastive loss (prototypes=None, weights=None)
#   grid axis = anchor-row tiles ("parallel"); the pre-transposed bf16 contrast
#   matrix, column inv-norms and column labels are resident (constant index_map);
#   each step writes the per-row loss for its tile (zeros for padded rows).
# ----------------------------------------------------------------------------
def _contrastive_kernel(a_ref, ft_ref, invr_ref, invc_ref, labr_ref, labc_ref,
                        out_ref, *, use_bf16_eup):
    tq = a_ref.shape[0]                                      # anchor rows in this tile
    n_p = ft_ref.shape[1]                                    # padded total rows (columns)
    row_start = pl.program_id(0) * tq

    # anchor_dot_contrast for this tile: bf16 MXU matmul in canonical NN form
    # (RHS pre-transposed once in the wrapper), f32 accumulation.
    raw = lax.dot_general(a_ref[...], ft_ref[...],
                          dimension_numbers=(((1,), (0,)), ((), ())),
                          preferred_element_type=jnp.float32)        # [tq, Np] f32

    # L2 normalization + 1/temperature applied post-matmul in f32; 1/T folded into
    # the [tq,1] row factor so only tq extra scalar muls are added.
    inv_r = invr_ref[...] * (1.0 / TEMPERATURE)                      # [tq, 1]  f32
    inv_c = invc_ref[...]                                            # [1, Np]  f32
    dots = raw * inv_r * inv_c                                       # [tq, Np] f32

    lab_r = labr_ref[...]                                            # [tq, 1] int32
    lab_c = labc_ref[...]                                            # [1, Np] int32
    same = lab_r == lab_c
    col_valid = lab_c >= 0                                           # pads have label -2
    row_valid = lab_r >= 0

    col_ids = lax.broadcasted_iota(jnp.int32, (tq, n_p), 1)
    row_ids = lax.broadcasted_iota(jnp.int32, (tq, n_p), 0) + row_start
    not_diag = row_ids != col_ids

    # Padded columns have exactly-zero raw features -> dots == 0 there, while every real
    # row's self-dot is ~1/T > 0, so the row max over real columns is unaffected by padding.
    logits_max = jnp.max(dots, axis=1, keepdims=True)
    logits = dots - logits_max                                       # [tq, Np] f32

    if use_bf16_eup:
        # bf16 exp/log halve the saturating EUP slot on v6e/v7x; reductions stay f32.
        exp_logits = jnp.exp(logits.astype(jnp.bfloat16))
    else:
        exp_logits = jnp.exp(logits)

    neg_mask = jnp.logical_and(jnp.logical_not(same), col_valid)
    neg_sum = jnp.sum(jnp.where(neg_mask, exp_logits.astype(jnp.float32), 0.0),
                      axis=1, keepdims=True)                         # [tq, 1] f32

    denom = exp_logits + neg_sum.astype(exp_logits.dtype)            # [tq, Np]
    log_prob = logits - jnp.log(denom).astype(jnp.float32)           # [tq, Np] f32

    pos_mask = jnp.logical_and(jnp.logical_and(same, not_diag), col_valid)
    pos_sum = jnp.sum(jnp.where(pos_mask, log_prob, 0.0), axis=1, keepdims=True)  # [tq, 1]
    pos_cnt = jnp.sum(jnp.where(pos_mask, 1.0, 0.0), axis=1, keepdims=True)       # [tq, 1]

    # Exact reciprocal on a tiny [tq,1] vector. Rows with zero positives contribute 0
    # (documented deviation: the torch reference would produce a 0/0 NaN there).
    mean_log_prob_pos = pos_sum / jnp.maximum(pos_cnt, 1.0)
    loss_rows = (-(TEMPERATURE / BASE_TEMPERATURE)) * mean_log_prob_pos
    out_ref[...] = jnp.where(row_valid, loss_rows, 0.0)


def _contrastive_loss_device(contrast_raw, labels_full, n_true):
    """contrast_raw: [N, C] raw (un-normalized) sampled rows on device; labels_full: np [N]."""
    N, C = contrast_raw.shape
    row_tile = _pick_row_tile(N)
    n_pad = int(pl.cdiv(N, row_tile)) * row_tile
    d_pad = int(pl.cdiv(C, 128)) * 128

    f32 = jnp.zeros((n_pad, d_pad), jnp.float32).at[:N, :C].set(contrast_raw.astype(jnp.float32))
    lab = jnp.full((n_pad,), PAD_LABEL, jnp.int32).at[:N].set(
        jnp.asarray(labels_full, dtype=jnp.int32))

    # Per-row inverse L2 norms (== F.normalize restricted to the sampled rows), applied in the
    # kernel post-matmul. Finite (not inf) for all-zero padded rows thanks to the clamp.
    ssq = jnp.sum(f32 * f32, axis=1, keepdims=True)                  # [n_pad, 1]
    inv = lax.rsqrt(jnp.maximum(ssq, 1e-24))                         # [n_pad, 1] f32

    f_bf = f32.astype(jnp.bfloat16)                                  # [n_pad, d_pad] anchors
    f_bf_t = f_bf.T                                                  # [d_pad, n_pad] resident RHS

    kernel = functools.partial(_contrastive_kernel,
                               use_bf16_eup=_use_bf16_transcendentals())

    per_row = pl.pallas_call(
        kernel,
        out_shape=jax.ShapeDtypeStruct((n_pad, 1), jnp.float32),
        grid=(n_pad // row_tile,),
        in_specs=[
            pl.BlockSpec((row_tile, d_pad), lambda i: (i, 0)),       # anchor tile (bf16)
            pl.BlockSpec((d_pad, n_pad), lambda i: (0, 0)),          # resident contrast^T (bf16)
            pl.BlockSpec((row_tile, 1), lambda i: (i, 0)),           # anchor-row inv norms
            pl.BlockSpec((1, n_pad), lambda i: (0, 0)),              # column inv norms (resident)
            pl.BlockSpec((row_tile, 1), lambda i: (i, 0)),           # anchor-row labels
            pl.BlockSpec((1, n_pad), lambda i: (0, 0)),              # column labels (resident)
        ],
        out_specs=pl.BlockSpec((row_tile, 1), lambda i: (i, 0)),
        compiler_params=pltpu.CompilerParams(
            dimension_semantics=("parallel",),
            vmem_limit_bytes=32 * 1024 * 1024),
    )(f_bf, f_bf_t, inv, inv.reshape(1, n_pad), lab.reshape(n_pad, 1), lab.reshape(1, n_pad))

    return jnp.sum(per_row) / jnp.float32(n_true)


# ----------------------------------------------------------------------------
# Host-side glue: hard anchor sampling (data-dependent dynamic shapes -> numpy).
# Returns pixel INDICES only, so the full feature map never leaves the device.
# TODO(synk): torch.randperm RNG cannot be reproduced bit-exactly; a seeded numpy
#             permutation is used instead (same distribution / semantics).
# ----------------------------------------------------------------------------
def _get_random_elements(num_hard_keep, num_easy_keep, rng, hard=None, easy=None):
    if hard is not None and easy is not None:
        perm = rng.permutation(hard.shape[0])
        h = hard[perm[:num_hard_keep]]
        perm = rng.permutation(easy.shape[0])
        e = easy[perm[:num_easy_keep]]
        return np.concatenate((h, e), axis=0)
    elif hard is not None:
        perm = rng.permutation(hard.shape[0])
        return hard[perm[:num_hard_keep]]
    else:
        perm = rng.permutation(easy.shape[0])
        return easy[perm[:num_easy_keep]]


def _hard_anchor_sampling_indices(y_hat, y, hw, rng, full_batch_sampling=False):
    """y_hat/y: np [n_imgs, HW] int.  Returns (sel_idx [T, n_view] of flat b*HW+p, labels [T])."""
    n_imgs = y_hat.shape[0]
    batch_size = n_imgs if full_batch_sampling else n_imgs // 2

    classes, total_classes = [], 0
    for ii in range(batch_size):
        this_y = y_hat[ii]
        cs = [int(c) for c in np.unique(this_y) if c != IGNORE_LABEL]
        cs = [c for c in cs if int((this_y == c).sum()) > MAX_VIEWS]
        classes.append(cs)
        total_classes += len(cs)
    if total_classes == 0:
        return None, None

    n_view = min(MAX_SAMPLES // total_classes, MAX_VIEWS)
    sel = np.zeros((total_classes, n_view), np.int64)
    y_ = np.zeros((total_classes,), np.int32)
    ptr = 0
    for ii in range(batch_size):
        yh_B, y_B = y_hat[ii], y[ii]
        for cls_id in classes[ii]:
            hard_idx_B = np.nonzero((yh_B == cls_id) & (y_B != cls_id))[0] + ii * hw
            easy_idx_B = np.nonzero((yh_B == cls_id) & (y_B == cls_id))[0] + ii * hw
            hard_idx_A_list, easy_idx_A_list, nhA, neA = [], [], 0, 0
            if full_batch_sampling:
                other = [i for i in range(batch_size) if i != ii]
            else:
                other = list(range(batch_size, batch_size * 2))
            for i in other:
                y_A, yh_A = y[i], y_hat[i]
                if cls_id in np.unique(y_A):
                    e_idx = np.nonzero((yh_A == cls_id) & (y_A == cls_id))[0]
                    if len(e_idx) > 0:
                        neA += len(e_idx)
                        easy_idx_A_list.append(e_idx + i * hw)
                h_idx = np.nonzero((yh_A == cls_id) & (y_A != cls_id))[0]
                if len(h_idx) > 0:
                    nhA += len(h_idx)
                    hard_idx_A_list.append(h_idx + i * hw)

            num_hard = nhA + len(hard_idx_B)
            num_easy = neA + len(easy_idx_B)
            if num_hard >= n_view / 2 and num_easy >= n_view / 2:
                num_hard_keep = n_view // 2
                num_easy_keep = n_view - num_hard_keep
            elif num_hard >= n_view / 2:
                num_easy_keep = num_easy
                num_hard_keep = n_view - num_easy_keep
            elif num_easy >= n_view / 2:
                num_hard_keep = num_hard
                num_easy_keep = n_view - num_hard_keep
            else:
                raise Exception('this should never be touched! {} {} {}'.format(
                    num_hard, num_easy, n_view))

            negB = num_hard_keep // 2
            posB = num_easy_keep // 2
            negA = num_hard_keep - negB
            posA = num_easy_keep - posB

            hardA_, easyA_ = None, None
            if nhA > 0:
                hardA_ = np.concatenate(hard_idx_A_list, axis=0)
                if hardA_.shape[0] < negA:
                    negA = hardA_.shape[0]; negB = num_hard_keep - negA
                elif len(hard_idx_B) < negB:
                    negB = len(hard_idx_B); negA = num_hard_keep - negB
            else:
                negB, negA = num_hard_keep, 0
            if neA > 0:
                easyA_ = np.concatenate(easy_idx_A_list, axis=0)
                if easyA_.shape[0] < posA:
                    posA = easyA_.shape[0]; posB = num_easy_keep - posA
                elif len(easy_idx_B) < posB:
                    posB = len(easy_idx_B); posA = num_easy_keep - posB
            else:
                posB, posA = num_easy_keep, 0

            idx_B = _get_random_elements(negB, posB, rng, hard=hard_idx_B, easy=easy_idx_B)
            if posA + negA > 0:
                idx_A = _get_random_elements(negA, posA, rng, hard=hardA_, easy=easyA_)
                idx = np.concatenate((idx_B, idx_A), axis=0)
            else:
                idx = idx_B
            sel[ptr, :] = idx
            y_[ptr] = cls_id
            ptr += 1
    return sel, y_


# ----------------------------------------------------------------------------
# Forward (== PixelContrastLoss().forward with default __init__ args:
#          prototypes=None, weights=None, full_batch_sampling=False)
# TODO(synk): forward only; no custom_vjp is defined, so this is not meant for autodiff.
# ----------------------------------------------------------------------------
def pixel_contrast_loss(feats, labels, predict, seed=0):
    """feats: [B, C, H, W] float (NCHW like PyTorch); labels/predict: [B, H, W] int."""
    B, C, H, W = feats.shape
    assert labels.shape[-1] == feats.shape[-1]
    hw = H * W

    # Only the (small) label / prediction maps go to host for the data-dependent sampling.
    y_hat = np.asarray(labels).reshape(B, -1)
    y = np.asarray(predict).reshape(B, -1)
    rng = np.random.default_rng(seed)
    sel_idx, labels_ = _hard_anchor_sampling_indices(y_hat, y, hw, rng)
    if sel_idx is None:
        # TODO(synk): original torch code would crash here; return 0 loss for the degenerate case.
        return jnp.zeros((), jnp.float32)

    T_cls, n_view = sel_idx.shape
    # contrast_feature = cat(unbind(feats_, dim=1), dim=0): row r <-> feats_[r % T, r // T]
    sel_flat = np.transpose(sel_idx, (1, 0)).reshape(-1)          # [N] flat indices (b*HW + p)
    labels_full = np.tile(labels_, n_view)                        # label of each contrast row
    N = T_cls * n_view

    # Channels-last gather: each sampled pixel reads one contiguous C*4-byte row instead of
    # C channel-strided elements from the NCHW layout.
    feats_rows = jnp.transpose(feats, (0, 2, 3, 1)).reshape(B * hw, C)
    contrast_raw = feats_rows[jnp.asarray(sel_flat.astype(np.int32))]   # [N, C]

    return _contrastive_loss_device(contrast_raw, labels_full, N)


# ----------------------------------------------------------------------------
# Pure-numpy reference of the contrastive branch (f64) for a correctness check.
# ----------------------------------------------------------------------------
def _reference_contrastive(contrast_np, labels_np):
    x = contrast_np.astype(np.float64)
    x = x / np.maximum(np.linalg.norm(x, axis=1, keepdims=True), 1e-12)
    n = x.shape[0]
    dots = (x @ x.T) / TEMPERATURE
    lab = labels_np.reshape(-1, 1)
    mask = (lab == lab.T).astype(np.float64)
    pos_mask = mask * (1.0 - np.eye(n))
    neg_mask = 1.0 - mask
    logits = dots - dots.max(axis=1, keepdims=True)
    e = np.exp(logits)
    neg_sum = (e * neg_mask).sum(axis=1, keepdims=True)
    log_prob = logits - np.log(e + neg_sum)
    mean_log_prob_pos = (pos_mask * log_prob).sum(axis=1) / pos_mask.sum(axis=1)
    return float((-(TEMPERATURE / BASE_TEMPERATURE) * mean_log_prob_pos).mean())


if __name__ == "__main__":
    key = jax.random.PRNGKey(0)
    B, C, H, W = 2, 16, 16, 16
    feats = jax.random.normal(key, (B, C, H, W), dtype=jnp.float32)

    HW = H * W
    p = np.arange(HW)
    labels_np = np.stack([(p >= HW // 2).astype(np.int32) for _ in range(B)])   # 2 classes, 128 px
    predict_np = (labels_np ^ (p % 2)).astype(np.int32)                         # half easy/half hard
    labels = jnp.asarray(labels_np.reshape(B, H, W))
    predict = jnp.asarray(predict_np.reshape(B, H, W))

    loss = pixel_contrast_loss(feats, labels, predict, seed=0)
    loss = jax.block_until_ready(loss)
    loss_val = float(np.asarray(loss))
    assert np.isfinite(loss_val), "loss is not finite"

    # Cross-check against the pure-numpy reference using the same sampled indices (same seed).
    rng = np.random.default_rng(0)
    sel, labs = _hard_anchor_sampling_indices(labels_np, predict_np, HW, rng)
    n_view = sel.shape[1]
    sel_flat = np.transpose(sel, (1, 0)).reshape(-1)
    labels_full = np.tile(labs, n_view)
    feats_host = np.asarray(feats).reshape(B, C, HW)
    contrast_np = feats_host[sel_flat // HW, :, sel_flat % HW]                  # [N, C]
    ref = _reference_contrastive(contrast_np, labels_full)
    rel_err = abs(loss_val - ref) / max(abs(ref), 1e-6)
    assert rel_err < 5e-2, f"loss mismatch: kernel={loss_val} ref={ref} rel={rel_err}"

    print("KERNEL_OK")
</pallas_src>

<mosaic_0001>
module attributes {stable_mosaic.version = 11 : i64} {
  func.func @_contrastive_kernel(%arg0: i32, %arg1: memref<256x128xbf16, #tpu.memory_space<vmem>>, %arg2: memref<128x256xbf16, #tpu.memory_space<vmem>>, %arg3: memref<256x1xf32, #tpu.memory_space<vmem>>, %arg4: memref<1x256xf32, #tpu.memory_space<vmem>>, %arg5: memref<256x1xi32, #tpu.memory_space<vmem>>, %arg6: memref<1x256xi32, #tpu.memory_space<vmem>>, %arg7: memref<256x1xf32, #tpu.memory_space<vmem>>) attributes {dimension_semantics = [#tpu.dimension_semantics<parallel>], iteration_bounds = array<i64: 1>, scalar_prefetch = 0 : i64, scratch_operands = 0 : i64, tpu.core_type = #tpu.core_type<tc>, window_params = [{transform_indices = @transform_0, window_bounds = array<i64: 256, 128>}, {pipeline_mode = #tpu.pipeline_mode<synchronous>, transform_indices = @transform_1, window_bounds = array<i64: 128, 256>}, {transform_indices = @transform_2, window_bounds = array<i64: 256, 1>}, {pipeline_mode = #tpu.pipeline_mode<synchronous>, transform_indices = @transform_3, window_bounds = array<i64: 1, 256>}, {transform_indices = @transform_4, window_bounds = array<i64: 256, 1>}, {pipeline_mode = #tpu.pipeline_mode<synchronous>, transform_indices = @transform_5, window_bounds = array<i64: 1, 256>}, {transform_indices = @transform_6, window_bounds = array<i64: 256, 1>}]} {
    %c256_i32 = arith.constant 256 : i32
    %0 = arith.muli %arg0, %c256_i32 : i32
    %c0 = arith.constant 0 : index
    %c0_0 = arith.constant 0 : index
    %1 = vector.load %arg1[%c0, %c0_0] : memref<256x128xbf16, #tpu.memory_space<vmem>>, vector<256x128xbf16>
    %c0_1 = arith.constant 0 : index
    %c0_2 = arith.constant 0 : index
    %2 = vector.load %arg2[%c0_1, %c0_2] : memref<128x256xbf16, #tpu.memory_space<vmem>>, vector<128x256xbf16>
    %cst = arith.constant dense<0.000000e+00> : vector<256x256xf32>
    %3 = tpu.matmul %1, %2, %cst {dimension_numbers = #tpu.dot_dimension_numbers<[1], [0], [0], [1], [0, 0, 1, 1], [], []>} : vector<256x128xbf16>, vector<128x256xbf16>, vector<256x256xf32> -> vector<256x256xf32>
    %c0_3 = arith.constant 0 : index
    %c0_4 = arith.constant 0 : index
    %4 = vector.load %arg3[%c0_3, %c0_4] : memref<256x1xf32, #tpu.memory_space<vmem>>, vector<256x1xf32>
    %cst_5 = arith.constant 1.000000e+01 : f32
    %5 = vector.broadcast %cst_5 : f32 to vector<256x1xf32>
    %6 = arith.mulf %4, %5 : vector<256x1xf32>
    %c0_6 = arith.constant 0 : index
    %c0_7 = arith.constant 0 : index
    %7 = vector.load %arg4[%c0_6, %c0_7] : memref<1x256xf32, #tpu.memory_space<vmem>>, vector<1x256xf32>
    %8 = vector.broadcast %6 : vector<256x1xf32> to vector<256x256xf32>
    %9 = arith.mulf %3, %8 : vector<256x256xf32>
    %10 = vector.broadcast %7 : vector<1x256xf32> to vector<256x256xf32>
    %11 = arith.mulf %9, %10 : vector<256x256xf32>
    %c0_8 = arith.constant 0 : index
    %c0_9 = arith.constant 0 : index
    %12 = vector.load %arg5[%c0_8, %c0_9] : memref<256x1xi32, #tpu.memory_space<vmem>>, vector<256x1xi32>
    %c0_10 = arith.constant 0 : index
    %c0_11 = arith.constant 0 : index
    %13 = vector.load %arg6[%c0_10, %c0_11] : memref<1x256xi32, #tpu.memory_space<vmem>>, vector<1x256xi32>
    %14 = vector.broadcast %12 : vector<256x1xi32> to vector<256x256xi32>
    %15 = vector.broadcast %13 : vector<1x256xi32> to vector<256x256xi32>
    %16 = arith.cmpi eq, %14, %15 : vector<256x256xi32>
    %c0_i32 = arith.constant 0 : i32
    %17 = vector.broadcast %c0_i32 : i32 to vector<1x256xi32>
    %18 = arith.cmpi sge, %13, %17 : vector<1x256xi32>
    %c0_i32_12 = arith.constant 0 : i32
    %19 = vector.broadcast %c0_i32_12 : i32 to vector<256x1xi32>
    %20 = arith.cmpi sge, %12, %19 : vector<256x1xi32>
    %21 = tpu.iota {dimensions = array<i32: 1>} : vector<256x256xi32>
    %22 = tpu.iota {dimensions = array<i32: 0>} : vector<256x256xi32>
    %23 = vector.broadcast %0 : i32 to vector<256x256xi32>
    %24 = arith.addi %22, %23 : vector<256x256xi32>
    %25 = arith.cmpi ne, %24, %21 : vector<256x256xi32>
    %cst_13 = arith.constant dense<0xFF800000> : vector<256xf32>
    %26 = vector.multi_reduction <maximumf>, %11, %cst_13 [1] : vector<256x256xf32> to vector<256xf32>
    %27 = vector.shape_cast %26 : vector<256xf32> to vector<256x1xf32>
    %28 = vector.broadcast %27 : vector<256x1xf32> to vector<256x256xf32>
    %29 = arith.subf %11, %28 : vector<256x256xf32>
    %30 = math.exp %29 : vector<256x256xf32>
    %cst_14 = arith.constant dense<true> : vector<256x256xi1>
    %31 = arith.xori %16, %cst_14 : vector<256x256xi1>
    %32 = vector.broadcast %18 : vector<1x256xi1> to vector<256x256xi1>
    %33 = arith.andi %31, %32 : vector<256x256xi1>
    %cst_15 = arith.constant 0.000000e+00 : f32
    %34 = vector.broadcast %cst_15 : f32 to vector<256x256xf32>
    %35 = arith.select %33, %30, %34 : vector<256x256xi1>, vector<256x256xf32>
    %cst_16 = arith.constant dense<0.000000e+00> : vector<256xf32>
    %36 = vector.multi_reduction <add>, %35, %cst_16 [1] : vector<256x256xf32> to vector<256xf32>
    %37 = vector.shape_cast %36 : vector<256xf32> to vector<256x1xf32>
    %38 = vector.broadcast %37 : vector<256x1xf32> to vector<256x256xf32>
    %39 = arith.addf %30, %38 : vector<256x256xf32>
    %40 = math.log %39 : vector<256x256xf32>
    %41 = arith.subf %29, %40 : vector<256x256xf32>
    %42 = arith.andi %16, %25 : vector<256x256xi1>
    %43 = vector.broadcast %18 : vector<1x256xi1> to vector<256x256xi1>
    %44 = arith.andi %42, %43 : vector<256x256xi1>
    %cst_17 = arith.constant 0.000000e+00 : f32
    %45 = vector.broadcast %cst_17 : f32 to vector<256x256xf32>
    %46 = arith.select %44, %41, %45 : vector<256x256xi1>, vector<256x256xf32>
    %cst_18 = arith.constant dense<0.000000e+00> : vector<256xf32>
    %47 = vector.multi_reduction <add>, %46, %cst_18 [1] : vector<256x256xf32> to vector<256xf32>
    %48 = vector.shape_cast %47 : vector<256xf32> to vector<256x1xf32>
    %cst_19 = arith.constant 1.000000e+00 : f32
    %cst_20 = arith.constant 0.000000e+00 : f32
    %49 = vector.broadcast %cst_19 : f32 to vector<256x256xf32>
    %50 = vector.broadcast %cst_20 : f32 to vector<256x256xf32>
    %51 = arith.select %44, %49, %50 : vector<256x256xi1>, vector<256x256xf32>
    %cst_21 = arith.constant dense<0.000000e+00> : vector<256xf32>
    %52 = vector.multi_reduction <add>, %51, %cst_21 [1] : vector<256x256xf32> to vector<256xf32>
    %53 = vector.shape_cast %52 : vector<256xf32> to vector<256x1xf32>
    %cst_22 = arith.constant 1.000000e+00 : f32
    %54 = vector.broadcast %cst_22 : f32 to vector<256x1xf32>
    %55 = arith.maximumf %53, %54 : vector<256x1xf32>
    %56 = arith.divf %48, %55 : vector<256x1xf32>
    %cst_23 = arith.constant -1.42857146 : f32
    %57 = vector.broadcast %cst_23 : f32 to vector<256x1xf32>
    %58 = arith.mulf %57, %56 : vector<256x1xf32>
    %cst_24 = arith.constant 0.000000e+00 : f32
    %59 = vector.broadcast %cst_24 : f32 to vector<256x1xf32>
    %60 = arith.select %20, %58, %59 : vector<256x1xi1>, vector<256x1xf32>
    %c0_25 = arith.constant 0 : index
    %c0_26 = arith.constant 0 : index
    %61 = vector.load %arg7[%c0_25, %c0_26] : memref<256x1xf32, #tpu.memory_space<vmem>>, vector<256x1xf32>
    tpu.vector_store %arg7[%c0_25, %c0_26], %60 {strides = array<i32>} : memref<256x1xf32, #tpu.memory_space<vmem>>, vector<256x1xf32>,
    return
  }
  func.func @transform_0(%arg0: i32) -> (i32, i32) {
    %c0_i32 = arith.constant 0 : i32
    %c0_i32_0 = arith.constant 0 : i32
    return %arg0, %c0_i32 : i32, i32
  }
  func.func @transform_1(%arg0: i32) -> (i32, i32) {
    %c0_i32 = arith.constant 0 : i32
    %c0_i32_0 = arith.constant 0 : i32
    %c0_i32_1 = arith.constant 0 : i32
    return %c0_i32, %c0_i32_0 : i32, i32
  }
  func.func @transform_2(%arg0: i32) -> (i32, i32) {
    %c0_i32 = arith.constant 0 : i32
    %c0_i32_0 = arith.constant 0 : i32
    return %arg0, %c0_i32 : i32, i32
  }
  func.func @transform_3(%arg0: i32) -> (i32, i32) {
    %c0_i32 = arith.constant 0 : i32
    %c0_i32_0 = arith.constant 0 : i32
    %c0_i32_1 = arith.constant 0 : i32
    return %c0_i32, %c0_i32_0 : i32, i32
  }
  func.func @transform_4(%arg0: i32) -> (i32, i32) {
    %c0_i32 = arith.constant 0 : i32
    %c0_i32_0 = arith.constant 0 : i32
    return %arg0, %c0_i32 : i32, i32
  }
  func.func @transform_5(%arg0: i32) -> (i32, i32) {
    %c0_i32 = arith.constant 0 : i32
    %c0_i32_0 = arith.constant 0 : i32
    %c0_i32_1 = arith.constant 0 : i32
    return %c0_i32, %c0_i32_0 : i32, i32
  }
  func.func @transform_6(%arg0: i32) -> (i32, i32) {
    %c0_i32 = arith.constant 0 : i32
    %c0_i32_0 = arith.constant 0 : i32
    return %arg0, %c0_i32 : i32, i32
  }
}

</mosaic_0001>

<llo_original>
// kernel: tpu_custom_call.1
$region0: #{tpu_custom_call.1}
  #allocation0 [shape = 'u32[]', space=smem, size = 0x4, offset = 0x4, fixed_abs, tag = 'smem constant byte address 0x4 - core index']
  #allocation1 [shape = 'u32[144,128]{1,0:T(1,128)}', space=vmem, size = 0x12000, scoped, tag = 'internal scratch']
  %s0 = inlined_call_operand.vmem [shape: bf16[256,128], index: 0, kind: input, shape index: {}]
  %s1 = inlined_call_operand.vmem [shape: bf16[128,256], index: 1, kind: input, shape index: {}]
  %s2 = inlined_call_operand.vmem [shape: f32[256,1], index: 2, kind: input, shape index: {}]
  %s3 = inlined_call_operand.vmem [shape: f32[1,256], index: 3, kind: input, shape index: {}]
  %s4 = inlined_call_operand.vmem [shape: s32[256,1], index: 4, kind: input, shape index: {}]
  %s5 = inlined_call_operand.vmem [shape: s32[1,256], index: 5, kind: input, shape index: {}]
  %s6 = inlined_call_operand.vmem [shape: f32[256,1], index: 6, kind: output, shape index: {}]
  %s7 = sld [smem:[#allocation0]]
  $region34: #{tpu_custom_call.1} parent=0
    _
  %s9 = ssub.s32 1, %s7
  %s10 = scalar_select 0, %s9, %s7
  // Predicated region
  $region2: #{tpu_custom_call.1} parent=0 // pred_check
    _
  $region3: #{tpu_custom_call.1} parent=0 // pred_check_branch
    %12 = sbr.rel (0) target = $region5
  $region4: #{tpu_custom_call.1} parent=0 // pred_region
    _
  $region5: #{tpu_custom_call.1} parent=0 // pred_fallthru
    _
  // Predicated region
  $region6: #{tpu_custom_call.1} parent=0 // pred_check
    _
  $region7: #{tpu_custom_call.1} parent=0 // pred_check_branch
    %14 = sbr.rel (0) target = $region9
  $region8: #{tpu_custom_call.1} parent=0 // pred_region
    _
  $region9: #{tpu_custom_call.1} parent=0 // pred_fallthru
    _
  // Predicated region
  $region10: #{tpu_custom_call.1} parent=0 // pred_check
    _
  $region11: #{tpu_custom_call.1} parent=0 // pred_check_branch
    %16 = sbr.rel (0) target = $region13
  $region12: #{tpu_custom_call.1} parent=0 // pred_region
    _
  $region13: #{tpu_custom_call.1} parent=0 // pred_fallthru
    _
  // Predicated region
  $region14: #{tpu_custom_call.1} parent=0 // pred_check
    _
  $region15: #{tpu_custom_call.1} parent=0 // pred_check_branch
    %18 = sbr.rel (0) target = $region17
  $region16: #{tpu_custom_call.1} parent=0 // pred_region
    _
  $region17: #{tpu_custom_call.1} parent=0 // pred_fallthru
    _
  // Predicated region
  $region18: #{tpu_custom_call.1} parent=0 // pred_check
    _
  $region19: #{tpu_custom_call.1} parent=0 // pred_check_branch
    %20 = sbr.rel (0) target = $region21
  $region20: #{tpu_custom_call.1} parent=0 // pred_region
    _
  $region21: #{tpu_custom_call.1} parent=0 // pred_fallthru
    _
  // Predicated region
  $region22: #{tpu_custom_call.1} parent=0 // pred_check
    _
  $region23: #{tpu_custom_call.1} parent=0 // pred_check_branch
    %22 = sbr.rel (0) target = $region25
  $region24: #{tpu_custom_call.1} parent=0 // pred_region
    _
  $region25: #{tpu_custom_call.1} parent=0 // pred_fallthru
    _
  %s24 = smul.u32 0, 256
  %v25 = vld [vmem:[%s0] sm:$0xf]
  %v26 = vld [vmem:[%s0 + $0x4] sm:$0xf]
  %v27 = vld [vmem:[%s0 + $0x8] sm:$0xf]
  %v28 = vld [vmem:[%s0 + $0xc] sm:$0xf]
  %v29 = vld [vmem:[%s0 + $0x10] sm:$0xf]
  %v30 = vld [vmem:[%s0 + $0x14] sm:$0xf]
  %v31 = vld [vmem:[%s0 + $0x18] sm:$0xf]
  %v32 = vld [vmem:[%s0 + $0x1c] sm:$0xf]
  %v33 = vld [vmem:[%s0 + $0x20] sm:$0xf]
  %v34 = vld [vmem:[%s0 + $0x24] sm:$0xf]
  %v35 = vld [vmem:[%s0 + $0x28] sm:$0xf]
  %v36 = vld [vmem:[%s0 + $0x2c] sm:$0xf]
  %v37 = vld [vmem:[%s0 + $0x30] sm:$0xf]
  %v38 = vld [vmem:[%s0 + $0x34] sm:$0xf]
  %v39 = vld [vmem:[%s0 + $0x38] sm:$0xf]
  %v40 = vld [vmem:[%s0 + $0x3c] sm:$0xf]
  %v41 = vld [vmem:[%s0 + $0x40] sm:$0xf]
  %v42 = vld [vmem:[%s0 + $0x44] sm:$0xf]
  %v43 = vld [vmem:[%s0 + $0x48] sm:$0xf]
  %v44 = vld [vmem:[%s0 + $0x4c] sm:$0xf]
  %v45 = vld [vmem:[%s0 + $0x50] sm:$0xf]
  %v46 = vld [vmem:[%s0 + $0x54] sm:$0xf]
  %v47 = vld [vmem:[%s0 + $0x58] sm:$0xf]
  %v48 = vld [vmem:[%s0 + $0x5c] sm:$0xf]
  %v49 = vld [vmem:[%s0 + $0x60] sm:$0xf]
  %v50 = vld [vmem:[%s0 + $0x64] sm:$0xf]
  %v51 = vld [vmem:[%s0 + $0x68] sm:$0xf]
  %v52 = vld [vmem:[%s0 + $0x6c] sm:$0xf]
  %v53 = vld [vmem:[%s0 + $0x70] sm:$0xf]
  %v54 = vld [vmem:[%s0 + $0x74] sm:$0xf]
  %v55 = vld [vmem:[%s0 + $0x78] sm:$0xf]
  %v56 = vld [vmem:[%s0 + $0x7c] sm:$0xf]
  %v57 = vld [vmem:[%s1] sm:$0xff]
  %v58 = vld [vmem:[%s1 + $0x8] sm:$0xff]
  %v59 = vld [vmem:[%s1 + $0x10] sm:$0xff]
  %v60 = vld [vmem:[%s1 + $0x18] sm:$0xff]
  %v61 = vld [vmem:[%s1 + $0x20] sm:$0xff]
  %v62 = vld [vmem:[%s1 + $0x28] sm:$0xff]
  %v63 = vld [vmem:[%s1 + $0x30] sm:$0xff]
  %v64 = vld [vmem:[%s1 + $0x38] sm:$0xff]
  %v65 = vld [vmem:[%s1 + $0x40] sm:$0xff]
  %v66 = vld [vmem:[%s1 + $0x48] sm:$0xff]
  %v67 = vld [vmem:[%s1 + $0x50] sm:$0xff]
  %v68 = vld [vmem:[%s1 + $0x58] sm:$0xff]
  %v69 = vld [vmem:[%s1 + $0x60] sm:$0xff]
  %v70 = vld [vmem:[%s1 + $0x68] sm:$0xff]
  %v71 = vld [vmem:[%s1 + $0x70] sm:$0xff]
  %v72 = vld [vmem:[%s1 + $0x78] sm:$0xff]
  %v105 = vunpack.c.l.b16 %v25
  %v106 = vunpack.c.l.b16 %v26
  %v107 = vunpack.c.l.b16 %v27
  %v108 = vunpack.c.l.b16 %v28
  %v109 = vunpack.c.l.b16 %v29
  %v110 = vunpack.c.l.b16 %v30
  %v111 = vunpack.c.l.b16 %v31
  %v112 = vunpack.c.l.b16 %v32
  %v113 = vunpack.c.l.b16 %v33
  %v114 = vunpack.c.l.b16 %v34
  %v115 = vunpack.c.l.b16 %v35
  %v116 = vunpack.c.l.b16 %v36
  %v117 = vunpack.c.l.b16 %v37
  %v118 = vunpack.c.l.b16 %v38
  %v119 = vunpack.c.l.b16 %v39
  %v120 = vunpack.c.l.b16 %v40
  %v121 = vunpack.c.l.b16 %v41
  %v122 = vunpack.c.l.b16 %v42
  %v123 = vunpack.c.l.b16 %v43
  %v124 = vunpack.c.l.b16 %v44
  %v125 = vunpack.c.l.b16 %v45
  %v126 = vunpack.c.l.b16 %v46
  %v127 = vunpack.c.l.b16 %v47
  %v128 = vunpack.c.l.b16 %v48
  %v129 = vunpack.c.l.b16 %v49
  %v130 = vunpack.c.l.b16 %v50
  %v131 = vunpack.c.l.b16 %v51
  %v132 = vunpack.c.l.b16 %v52
  %v133 = vunpack.c.l.b16 %v53
  %v134 = vunpack.c.l.b16 %v54
  %v135 = vunpack.c.l.b16 %v55
  %v136 = vunpack.c.l.b16 %v56
  %v137 = vpack.c.b16 %v106, %v105
  %v138 = vpack.c.b16 %v108, %v107
  %v139 = vpack.c.b16 %v110, %v109
  %v140 = vpack.c.b16 %v112, %v111
  %v141 = vpack.c.b16 %v114, %v113
  %v142 = vpack.c.b16 %v116, %v115
  %v143 = vpack.c.b16 %v118, %v117
  %v144 = vpack.c.b16 %v120, %v119
  %v145 = vpack.c.b16 %v122, %v121
  %v146 = vpack.c.b16 %v124, %v123
  %v147 = vpack.c.b16 %v126, %v125
  %v148 = vpack.c.b16 %v128, %v127
  %v149 = vpack.c.b16 %v130, %v129
  %v150 = vpack.c.b16 %v132, %v131
  %v151 = vpack.c.b16 %v134, %v133
  %v152 = vpack.c.b16 %v136, %v135
  %v185 = vunpack.c.l.b16 %v57
  %v186 = vunpack.c.h.b16 %v57
  %v187 = vunpack.c.l.b16 %v58
  %v188 = vunpack.c.h.b16 %v58
  %v189 = vunpack.c.l.b16 %v59
  %v190 = vunpack.c.h.b16 %v59
  %v191 = vunpack.c.l.b16 %v60
  %v192 = vunpack.c.h.b16 %v60
  %v193 = vunpack.c.l.b16 %v61
  %v194 = vunpack.c.h.b16 %v61
  %v195 = vunpack.c.l.b16 %v62
  %v196 = vunpack.c.h.b16 %v62
  %v197 = vunpack.c.l.b16 %v63
  %v198 = vunpack.c.h.b16 %v63
  %v199 = vunpack.c.l.b16 %v64
  %v200 = vunpack.c.h.b16 %v64
  %v201 = vunpack.c.l.b16 %v65
  %v202 = vunpack.c.h.b16 %v65
  %v203 = vunpack.c.l.b16 %v66
  %v204 = vunpack.c.h.b16 %v66
  %v205 = vunpack.c.l.b16 %v67
  %v206 = vunpack.c.h.b16 %v67
  %v207 = vunpack.c.l.b16 %v68
  %v208 = vunpack.c.h.b16 %v68
  %v209 = vunpack.c.l.b16 %v69
  %v210 = vunpack.c.h.b16 %v69
  %v211 = vunpack.c.l.b16 %v70
  %v212 = vunpack.c.h.b16 %v70
  %v213 = vunpack.c.l.b16 %v71
  %v214 = vunpack.c.h.b16 %v71
  %v215 = vunpack.c.l.b16 %v72
  %v216 = vunpack.c.h.b16 %v72
  %v217 = vpack.c.b16 %v187, %v185
  %v218 = vpack.c.b16 %v188, %v186
  %v219 = vpack.c.b16 %v191, %v189
  %v220 = vpack.c.b16 %v192, %v190
  %v221 = vpack.c.b16 %v195, %v193
  %v222 = vpack.c.b16 %v196, %v194
  %v223 = vpack.c.b16 %v199, %v197
  %v224 = vpack.c.b16 %v200, %v198
  %v225 = vpack.c.b16 %v203, %v201
  %v226 = vpack.c.b16 %v204, %v202
  %v227 = vpack.c.b16 %v207, %v205
  %v228 = vpack.c.b16 %v208, %v206
  %v229 = vpack.c.b16 %v211, %v209
  %v230 = vpack.c.b16 %v212, %v210
  %v231 = vpack.c.b16 %v215, %v213
  %v232 = vpack.c.b16 %v216, %v214
  %249 = vmatprep.subr.bf16.mxu0 %v232
  %250 = vmatpush1.bf16.msra.mxu0 %v231
  %251 = vmatprep.subr.bf16.mxu0 %v230
  %252 = vmatpush1.bf16.msra.mxu0 %v229
  %253 = vmatprep.subr.bf16.mxu0 %v228
  %254 = vmatpush1.bf16.msra.mxu0 %v227
  %255 = vmatprep.subr.bf16.mxu0 %v226
  %256 = vmatpush1.bf16.msra.mxu0 %v225
  %257 = vmatprep.subr.bf16.mxu0 %v224
  %258 = vmatpush1.bf16.msra.mxu0 %v223
  %259 = vmatprep.subr.bf16.mxu0 %v222
  %260 = vmatpush1.bf16.msra.mxu0 %v221
  %261 = vmatprep.subr.bf16.mxu0 %v220
  %262 = vmatpush1.bf16.msra.mxu0 %v219
  %263 = vmatprep.subr.bf16.mxu0 %v218
  %264 = vmatpush1.bf16.msra.mxu0 %v217
  %265 = vmatprep.subr.bf16.mxu0 0
  %266 = vmatpush2.bf16.msra.mxu0 0
  %267 = vmatprep.subr.bf16.mxu0 0
  %268 = vmatpush2.bf16.msra.mxu0 0
  %269 = vmatprep.subr.bf16.mxu0 0
  %270 = vmatpush2.bf16.msra.mxu0 0
  %271 = vmatprep.subr.bf16.mxu0 0
  %272 = vmatpush2.bf16.msra.mxu0 0
  %273 = vmatprep.subr.bf16.mxu0 0
  %274 = vmatpush2.bf16.msra.mxu0 0
  %275 = vmatprep.subr.bf16.mxu0 0
  %276 = vmatpush2.bf16.msra.mxu0 0
  %277 = vmatprep.subr.bf16.mxu0 0
  %278 = vmatpush2.bf16.msra.mxu0 0
  %279 = vmatprep.subr.bf16.mxu0 0
  %280 = vmatpush2.bf16.msra.mxu0 0
  %281 = vmatprep.mubr.bf16.mxu0 0
  %282 = vmatmul.mubr.bf16.gmra.mxu0 %v137
  %v283 = vpop.f32.mrf.mxu0
  %v284 = vadd.f32 0.0, %v283
  %v285 = vpop.f32.mrf.mxu0
  %v286 = vadd.f32 0.0, %v285
  %v287 = vpop.f32.mrf.mxu0
  %v288 = vadd.f32 0.0, %v287
  %v289 = vpop.f32.mrf.mxu0
  %v290 = vadd.f32 0.0, %v289
  %291 = vmatprep.mubr.bf16.mxu0 0
  %292 = vmatmul.mubr.bf16.gmra.mxu0 %v138
  %v293 = vpop.f32.mrf.mxu0
  %v294 = vadd.f32 0.0, %v293
  %v295 = vpop.f32.mrf.mxu0
  %v296 = vadd.f32 0.0, %v295
  %v297 = vpop.f32.mrf.mxu0
  %v298 = vadd.f32 0.0, %v297
  %v299 = vpop.f32.mrf.mxu0
  %v300 = vadd.f32 0.0, %v299
  %301 = vmatprep.mubr.bf16.mxu0 0
  %302 = vmatmul.mubr.bf16.gmra.mxu0 %v139
  %v303 = vpop.f32.mrf.mxu0
  %v304 = vadd.f32 0.0, %v303
  %v305 = vpop.f32.mrf.mxu0
  %v306 = vadd.f32 0.0, %v305
  %v307 = vpop.f32.mrf.mxu0
  %v308 = vadd.f32 0.0, %v307
  %v309 = vpop.f32.mrf.mxu0
  %v310 = vadd.f32 0.0, %v309
  %311 = vmatprep.mubr.bf16.mxu0 0
  %312 = vmatmul.mubr.bf16.gmra.mxu0 %v140
  %v313 = vpop.f32.mrf.mxu0
  %v314 = vadd.f32 0.0, %v313
  %v315 = vpop.f32.mrf.mxu0
  %v316 = vadd.f32 0.0, %v315
  %v317 = vpop.f32.mrf.mxu0
  %v318 = vadd.f32 0.0, %v317
  %v319 = vpop.f32.mrf.mxu0
  %v320 = vadd.f32 0.0, %v319
  %321 = vmatprep.mubr.bf16.mxu0 0
  %322 = vmatmul.mubr.bf16.gmra.mxu0 %v141
  %v323 = vpop.f32.mrf.mxu0
  %v324 = vadd.f32 0.0, %v323
  %v325 = vpop.f32.mrf.mxu0
  %v326 = vadd.f32 0.0, %v325
  %v327 = vpop.f32.mrf.mxu0
  %v328 = vadd.f32 0.0, %v327
  %v329 = vpop.f32.mrf.mxu0
  %v330 = vadd.f32 0.0, %v329
  %331 = vmatprep.mubr.bf16.mxu0 0
  %332 = vmatmul.mubr.bf16.gmra.mxu0 %v142
  %v333 = vpop.f32.mrf.mxu0
  %v334 = vadd.f32 0.0, %v333
  %v335 = vpop.f32.mrf.mxu0
  %v336 = vadd.f32 0.0, %v335
  %v337 = vpop.f32.mrf.mxu0
  %v338 = vadd.f32 0.0, %v337
  %v339 = vpop.f32.mrf.mxu0
  %v340 = vadd.f32 0.0, %v339
  %341 = vmatprep.mubr.bf16.mxu0 0
  %342 = vmatmul.mubr.bf16.gmra.mxu0 %v143
  %v343 = vpop.f32.mrf.mxu0
  %v344 = vadd.f32 0.0, %v343
  %v345 = vpop.f32.mrf.mxu0
  %v346 = vadd.f32 0.0, %v345
  %v347 = vpop.f32.mrf.mxu0
  %v348 = vadd.f32 0.0, %v347
  %v349 = vpop.f32.mrf.mxu0
  %v350 = vadd.f32 0.0, %v349
  %351 = vmatprep.mubr.bf16.mxu0 0
  %352 = vmatmul.mubr.bf16.gmra.mxu0 %v144
  %v353 = vpop.f32.mrf.mxu0
  %v354 = vadd.f32 0.0, %v353
  %v355 = vpop.f32.mrf.mxu0
  %v356 = vadd.f32 0.0, %v355
  %v357 = vpop.f32.mrf.mxu0
  %v358 = vadd.f32 0.0, %v357
  %v359 = vpop.f32.mrf.mxu0
  %v360 = vadd.f32 0.0, %v359
  %361 = vmatprep.mubr.bf16.mxu0 0
  %362 = vmatmul.mubr.bf16.gmra.mxu0 %v145
  %v363 = vpop.f32.mrf.mxu0
  %v364 = vadd.f32 0.0, %v363
  %v365 = vpop.f32.mrf.mxu0
  %v366 = vadd.f32 0.0, %v365
  %v367 = vpop.f32.mrf.mxu0
  %v368 = vadd.f32 0.0, %v367
  %v369 = vpop.f32.mrf.mxu0
  %v370 = vadd.f32 0.0, %v369
  %371 = vmatprep.mubr.bf16.mxu0 0
  %372 = vmatmul.mubr.bf16.gmra.mxu0 %v146
  %v373 = vpop.f32.mrf.mxu0
  %v374 = vadd.f32 0.0, %v373
  %v375 = vpop.f32.mrf.mxu0
  %v376 = vadd.f32 0.0, %v375
  %v377 = vpop.f32.mrf.mxu0
  %v378 = vadd.f32 0.0, %v377
  %v379 = vpop.f32.mrf.mxu0
  %v380 = vadd.f32 0.0, %v379
  %381 = vmatprep.mubr.bf16.mxu0 0
  %382 = vmatmul.mubr.bf16.gmra.mxu0 %v147
  %v383 = vpop.f32.mrf.mxu0
  %v384 = vadd.f32 0.0, %v383
  %v385 = vpop.f32.mrf.mxu0
  %v386 = vadd.f32 0.0, %v385
  %v387 = vpop.f32.mrf.mxu0
  %v388 = vadd.f32 0.0, %v387
  %v389 = vpop.f32.mrf.mxu0
  %v390 = vadd.f32 0.0, %v389
  %391 = vmatprep.mubr.bf16.mxu0 0
  %392 = vmatmul.mubr.bf16.gmra.mxu0 %v148
  %v393 = vpop.f32.mrf.mxu0
  %v394 = vadd.f32 0.0, %v393
  %v395 = vpop.f32.mrf.mxu0
  %v396 = vadd.f32 0.0, %v395
  %v397 = vpop.f32.mrf.mxu0
  %v398 = vadd.f32 0.0, %v397
  %v399 = vpop.f32.mrf.mxu0
  %v400 = vadd.f32 0.0, %v399
  %401 = vmatprep.mubr.bf16.mxu0 0
  %402 = vmatmul.mubr.bf16.gmra.mxu0 %v149
  %v403 = vpop.f32.mrf.mxu0
  %v404 = vadd.f32 0.0, %v403
  %v405 = vpop.f32.mrf.mxu0
  %v406 = vadd.f32 0.0, %v405
  %v407 = vpop.f32.mrf.mxu0
  %v408 = vadd.f32 0.0, %v407
  %v409 = vpop.f32.mrf.mxu0
  %v410 = vadd.f32 0.0, %v409
  %411 = vmatprep.mubr.bf16.mxu0 0
  %412 = vmatmul.mubr.bf16.gmra.mxu0 %v150
  %v413 = vpop.f32.mrf.mxu0
  %v414 = vadd.f32 0.0, %v413
  %v415 = vpop.f32.mrf.mxu0
  %v416 = vadd.f32 0.0, %v415
  %v417 = vpop.f32.mrf.mxu0
  %v418 = vadd.f32 0.0, %v417
  %v419 = vpop.f32.mrf.mxu0
  %v420 = vadd.f32 0.0, %v419
  %421 = vmatprep.mubr.bf16.mxu0 0
  %422 = vmatmul.mubr.bf16.gmra.mxu0 %v151
  %v423 = vpop.f32.mrf.mxu0
  %v424 = vadd.f32 0.0, %v423
  %v425 = vpop.f32.mrf.mxu0
  %v426 = vadd.f32 0.0, %v425
  %v427 = vpop.f32.mrf.mxu0
  %v428 = vadd.f32 0.0, %v427
  %v429 = vpop.f32.mrf.mxu0
  %v430 = vadd.f32 0.0, %v429
  %431 = vmatprep.mubr.bf16.mxu0 0
  %432 = vmatmul.mubr.bf16.gmra.mxu0 %v152
  %v433 = vpop.f32.mrf.mxu0
  %v434 = vadd.f32 0.0, %v433
  %v435 = vpop.f32.mrf.mxu0
  %v436 = vadd.f32 0.0, %v435
  %v437 = vpop.f32.mrf.mxu0
  %v438 = vadd.f32 0.0, %v437
  %v439 = vpop.f32.mrf.mxu0
  %v440 = vadd.f32 0.0, %v439
  %441 = vdwg.mxu0
  %v442 = vld [vmem:[%s2] sm:$0xff]
  %v443 = vld [vmem:[%s2 + $0x8] sm:$0xff]
  %v444 = vld [vmem:[%s2 + $0x10] sm:$0xff]
  %v445 = vld [vmem:[%s2 + $0x18] sm:$0xff]
  %v446 = vld [vmem:[%s2 + $0x20] sm:$0xff]
  %v447 = vld [vmem:[%s2 + $0x28] sm:$0xff]
  %v448 = vld [vmem:[%s2 + $0x30] sm:$0xff]
  %v449 = vld [vmem:[%s2 + $0x38] sm:$0xff]
  %v450 = vld [vmem:[%s2 + $0x40] sm:$0xff]
  %v451 = vld [vmem:[%s2 + $0x48] sm:$0xff]
  %v452 = vld [vmem:[%s2 + $0x50] sm:$0xff]
  %v453 = vld [vmem:[%s2 + $0x58] sm:$0xff]
  %v454 = vld [vmem:[%s2 + $0x60] sm:$0xff]
  %v455 = vld [vmem:[%s2 + $0x68] sm:$0xff]
  %v456 = vld [vmem:[%s2 + $0x70] sm:$0xff]
  %v457 = vld [vmem:[%s2 + $0x78] sm:$0xff]
  %v458 = vld [vmem:[%s2 + $0x80] sm:$0xff]
  %v459 = vld [vmem:[%s2 + $0x88] sm:$0xff]
  %v460 = vld [vmem:[%s2 + $0x90] sm:$0xff]
  %v461 = vld [vmem:[%s2 + $0x98] sm:$0xff]
  %v462 = vld [vmem:[%s2 + $0xa0] sm:$0xff]
  %v463 = vld [vmem:[%s2 + $0xa8] sm:$0xff]
  %v464 = vld [vmem:[%s2 + $0xb0] sm:$0xff]
  %v465 = vld [vmem:[%s2 + $0xb8] sm:$0xff]
  %v466 = vld [vmem:[%s2 + $0xc0] sm:$0xff]
  %v467 = vld [vmem:[%s2 + $0xc8] sm:$0xff]
  %v468 = vld [vmem:[%s2 + $0xd0] sm:$0xff]
  %v469 = vld [vmem:[%s2 + $0xd8] sm:$0xff]
  %v470 = vld [vmem:[%s2 + $0xe0] sm:$0xff]
  %v471 = vld [vmem:[%s2 + $0xe8] sm:$0xff]
  %v472 = vld [vmem:[%s2 + $0xf0] sm:$0xff]
  %v473 = vld [vmem:[%s2 + $0xf8] sm:$0xff]
  %v474 = vmul.f32 %v442, 10.0
  %v475 = vmul.f32 %v443, 10.0
  %v476 = vmul.f32 %v444, 10.0
  %v477 = vmul.f32 %v445, 10.0
  %v478 = vmul.f32 %v446, 10.0
  %v479 = vmul.f32 %v447, 10.0
  %v480 = vmul.f32 %v448, 10.0
  %v481 = vmul.f32 %v449, 10.0
  %v482 = vmul.f32 %v450, 10.0
  %v483 = vmul.f32 %v451, 10.0
  %v484 = vmul.f32 %v452, 10.0
  %v485 = vmul.f32 %v453, 10.0
  %v486 = vmul.f32 %v454, 10.0
  %v487 = vmul.f32 %v455, 10.0
  %v488 = vmul.f32 %v456, 10.0
  %v489 = vmul.f32 %v457, 10.0
  %v490 = vmul.f32 %v458, 10.0
  %v491 = vmul.f32 %v459, 10.0
  %v492 = vmul.f32 %v460, 10.0
  %v493 = vmul.f32 %v461, 10.0
  %v494 = vmul.f32 %v462, 10.0
  %v495 = vmul.f32 %v463, 10.0
  %v496 = vmul.f32 %v464, 10.0
  %v497 = vmul.f32 %v465, 10.0
  %v498 = vmul.f32 %v466, 10.0
  %v499 = vmul.f32 %v467, 10.0
  %v500 = vmul.f32 %v468, 10.0
  %v501 = vmul.f32 %v469, 10.0
  %v502 = vmul.f32 %v470, 10.0
  %v503 = vmul.f32 %v471, 10.0
  %v504 = vmul.f32 %v472, 10.0
  %v505 = vmul.f32 %v473, 10.0
  %v506 = vld [vmem:[%s3] sm:$0x3]
  %508 = vset.pattern.permute.xlu0 0
  %509 = vperm.xlu0 %508, %v474
  %v510 = vpop.permute.xlu0 %509
  %513 = vset.pattern.permute.xlu0 0
  %514 = vperm.xlu0 %513, %v475
  %v515 = vpop.permute.xlu0 %514
  %518 = vset.pattern.permute.xlu0 0
  %519 = vperm.xlu0 %518, %v476
  %v520 = vpop.permute.xlu0 %519
  %523 = vset.pattern.permute.xlu0 0
  %524 = vperm.xlu0 %523, %v477
  %v525 = vpop.permute.xlu0 %524
  %528 = vset.pattern.permute.xlu0 0
  %529 = vperm.xlu0 %528, %v478
  %v530 = vpop.permute.xlu0 %529
  %533 = vset.pattern.permute.xlu0 0
  %534 = vperm.xlu0 %533, %v479
  %v535 = vpop.permute.xlu0 %534
  %538 = vset.pattern.permute.xlu0 0
  %539 = vperm.xlu0 %538, %v480
  %v540 = vpop.permute.xlu0 %539
  %543 = vset.pattern.permute.xlu0 0
  %544 = vperm.xlu0 %543, %v481
  %v545 = vpop.permute.xlu0 %544
  %548 = vset.pattern.permute.xlu0 0
  %549 = vperm.xlu0 %548, %v482
  %v550 = vpop.permute.xlu0 %549
  %553 = vset.pattern.permute.xlu0 0
  %554 = vperm.xlu0 %553, %v483
  %v555 = vpop.permute.xlu0 %554
  %558 = vset.pattern.permute.xlu0 0
  %559 = vperm.xlu0 %558, %v484
  %v560 = vpop.permute.xlu0 %559
  %563 = vset.pattern.permute.xlu0 0
  %564 = vperm.xlu0 %563, %v485
  %v565 = vpop.permute.xlu0 %564
  %568 = vset.pattern.permute.xlu0 0
  %569 = vperm.xlu0 %568, %v486
  %v570 = vpop.permute.xlu0 %569
  %573 = vset.pattern.permute.xlu0 0
  %574 = vperm.xlu0 %573, %v487
  %v575 = vpop.permute.xlu0 %574
  %578 = vset.pattern.permute.xlu0 0
  %579 = vperm.xlu0 %578, %v488
  %v580 = vpop.permute.xlu0 %579
  %583 = vset.pattern.permute.xlu0 0
  %584 = vperm.xlu0 %583, %v489
  %v585 = vpop.permute.xlu0 %584
  %588 = vset.pattern.permute.xlu0 0
  %589 = vperm.xlu0 %588, %v490
  %v590 = vpop.permute.xlu0 %589
  %593 = vset.pattern.permute.xlu0 0
  %594 = vperm.xlu0 %593, %v491
  %v595 = vpop.permute.xlu0 %594
  %598 = vset.pattern.permute.xlu0 0
  %599 = vperm.xlu0 %598, %v492
  %v600 = vpop.permute.xlu0 %599
  %603 = vset.pattern.permute.xlu0 0
  %604 = vperm.xlu0 %603, %v493
  %v605 = vpop.permute.xlu0 %604
  %608 = vset.pattern.permute.xlu0 0
  %609 = vperm.xlu0 %608, %v494
  %v610 = vpop.permute.xlu0 %609
  %613 = vset.pattern.permute.xlu0 0
  %614 = vperm.xlu0 %613, %v495
  %v615 = vpop.permute.xlu0 %614
  %618 = vset.pattern.permute.xlu0 0
  %619 = vperm.xlu0 %618, %v496
  %v620 = vpop.permute.xlu0 %619
  %623 = vset.pattern.permute.xlu0 0
  %624 = vperm.xlu0 %623, %v497
  %v625 = vpop.permute.xlu0 %624
  %628 = vset.pattern.permute.xlu0 0
  %629 = vperm.xlu0 %628, %v498
  %v630 = vpop.permute.xlu0 %629
  %633 = vset.pattern.permute.xlu0 0
  %634 = vperm.xlu0 %633, %v499
  %v635 = vpop.permute.xlu0 %634
  %638 = vset.pattern.permute.xlu0 0
  %639 = vperm.xlu0 %638, %v500
  %v640 = vpop.permute.xlu0 %639
  %643 = vset.pattern.permute.xlu0 0
  %644 = vperm.xlu0 %643, %v501
  %v645 = vpop.permute.xlu0 %644
  %648 = vset.pattern.permute.xlu0 0
  %649 = vperm.xlu0 %648, %v502
  %v650 = vpop.permute.xlu0 %649
  %653 = vset.pattern.permute.xlu0 0
  %654 = vperm.xlu0 %653, %v503
  %v655 = vpop.permute.xlu0 %654
  %658 = vset.pattern.permute.xlu0 0
  %659 = vperm.xlu0 %658, %v504
  %v660 = vpop.permute.xlu0 %659
  %663 = vset.pattern.permute.xlu0 0
  %664 = vperm.xlu0 %663, %v505
  %v665 = vpop.permute.xlu0 %664
  %v667 = vmul.f32 %v284, %v510
  %v668 = vmul.f32 %v286, %v510
  %v669 = vmul.f32 %v288, %v515
  %v670 = vmul.f32 %v290, %v515
  %v671 = vmul.f32 %v294, %v520
  %v672 = vmul.f32 %v296, %v520
  %v673 = vmul.f32 %v298, %v525
  %v674 = vmul.f32 %v300, %v525
  %v675 = vmul.f32 %v304, %v530
  %v676 = vmul.f32 %v306, %v530
  %v677 = vmul.f32 %v308, %v535
  %v678 = vmul.f32 %v310, %v535
  %v679 = vmul.f32 %v314, %v540
  %v680 = vmul.f32 %v316, %v540
  %v681 = vmul.f32 %v318, %v545
  %v682 = vmul.f32 %v320, %v545
  %v683 = vmul.f32 %v324, %v550
  %v684 = vmul.f32 %v326, %v550
  %v685 = vmul.f32 %v328, %v555
  %v686 = vmul.f32 %v330, %v555
  %v687 = vmul.f32 %v334, %v560
  %v688 = vmul.f32 %v336, %v560
  %v689 = vmul.f32 %v338, %v565
  %v690 = vmul.f32 %v340, %v565
  %v691 = vmul.f32 %v344, %v570
  %v692 = vmul.f32 %v346, %v570
  %v693 = vmul.f32 %v348, %v575
  %v694 = vmul.f32 %v350, %v575
  %v695 = vmul.f32 %v354, %v580
  %v696 = vmul.f32 %v356, %v580
  %v697 = vmul.f32 %v358, %v585
  %v698 = vmul.f32 %v360, %v585
  %v699 = vmul.f32 %v364, %v590
  %v700 = vmul.f32 %v366, %v590
  %v701 = vmul.f32 %v368, %v595
  %v702 = vmul.f32 %v370, %v595
  %v703 = vmul.f32 %v374, %v600
  %v704 = vmul.f32 %v376, %v600
  %v705 = vmul.f32 %v378, %v605
  %v706 = vmul.f32 %v380, %v605
  %v707 = vmul.f32 %v384, %v610
  %v708 = vmul.f32 %v386, %v610
  %v709 = vmul.f32 %v388, %v615
  %v710 = vmul.f32 %v390, %v615
  %v711 = vmul.f32 %v394, %v620
  %v712 = vmul.f32 %v396, %v620
  %v713 = vmul.f32 %v398, %v625
  %v714 = vmul.f32 %v400, %v625
  %v715 = vmul.f32 %v404, %v630
  %v716 = vmul.f32 %v406, %v630
  %v717 = vmul.f32 %v408, %v635
  %v718 = vmul.f32 %v410, %v635
  %v719 = vmul.f32 %v414, %v640
  %v720 = vmul.f32 %v416, %v640
  %v721 = vmul.f32 %v418, %v645
  %v722 = vmul.f32 %v420, %v645
  %v723 = vmul.f32 %v424, %v650
  %v724 = vmul.f32 %v426, %v650
  %v725 = vmul.f32 %v428, %v655
  %v726 = vmul.f32 %v430, %v655
  %v727 = vmul.f32 %v434, %v660
  %v728 = vmul.f32 %v436, %v660
  %v729 = vmul.f32 %v438, %v665
  %v730 = vmul.f32 %v440, %v665
  %v732 = vlaneseq
  %v733 = vshrl.u32 %v732, 7
  %v734 = vsub.s32 0, %v733
  %v735 = vrot.slane %v506, %v734
  %v736 = vlaneseq
  %v737 = vshrl.u32 %v736, 7
  %v738 = vsub.s32 1, %v737
  %v739 = vrot.slane %v506, %v738
  %v742 = vmul.f32 %v667, %v735
  %v743 = vmul.f32 %v668, %v739
  %v744 = vmul.f32 %v669, %v735
  %v745 = vmul.f32 %v670, %v739
  %v746 = vmul.f32 %v671, %v735
  %v747 = vmul.f32 %v672, %v739
  %v748 = vmul.f32 %v673, %v735
  %v749 = vmul.f32 %v674, %v739
  %v750 = vmul.f32 %v675, %v735
  %v751 = vmul.f32 %v676, %v739
  %v752 = vmul.f32 %v677, %v735
  %v753 = vmul.f32 %v678, %v739
  %v754 = vmul.f32 %v679, %v735
  %v755 = vmul.f32 %v680, %v739
  %v756 = vmul.f32 %v681, %v735
  %v757 = vmul.f32 %v682, %v739
  %v758 = vmul.f32 %v683, %v735
  %v759 = vmul.f32 %v684, %v739
  %v760 = vmul.f32 %v685, %v735
  %v761 = vmul.f32 %v686, %v739
  %v762 = vmul.f32 %v687, %v735
  %v763 = vmul.f32 %v688, %v739
  %v764 = vmul.f32 %v689, %v735
  %v765 = vmul.f32 %v690, %v739
  %v766 = vmul.f32 %v691, %v735
  %v767 = vmul.f32 %v692, %v739
  %v768 = vmul.f32 %v693, %v735
  %v769 = vmul.f32 %v694, %v739
  %v770 = vmul.f32 %v695, %v735
  %v771 = vmul.f32 %v696, %v739
  %v772 = vmul.f32 %v697, %v735
  %v773 = vmul.f32 %v698, %v739
  %v774 = vmul.f32 %v699, %v735
  %v775 = vmul.f32 %v700, %v739
  %v776 = vmul.f32 %v701, %v735
  %v777 = vmul.f32 %v702, %v739
  %v778 = vmul.f32 %v703, %v735
  %v779 = vmul.f32 %v704, %v739
  %v780 = vmul.f32 %v705, %v735
  %v781 = vmul.f32 %v706, %v739
  %v782 = vmul.f32 %v707, %v735
  %v783 = vmul.f32 %v708, %v739
  %v784 = vmul.f32 %v709, %v735
  %v785 = vmul.f32 %v710, %v739
  %v786 = vmul.f32 %v711, %v735
  %v787 = vmul.f32 %v712, %v739
  %v788 = vmul.f32 %v713, %v735
  %v789 = vmul.f32 %v714, %v739
  %v790 = vmul.f32 %v715, %v735
  %v791 = vmul.f32 %v716, %v739
  %v792 = vmul.f32 %v717, %v735
  %v793 = vmul.f32 %v718, %v739
  %v794 = vmul.f32 %v719, %v735
  %v795 = vmul.f32 %v720, %v739
  %v796 = vmul.f32 %v721, %v735
  %v797 = vmul.f32 %v722, %v739
  %v798 = vmul.f32 %v723, %v735
  %v799 = vmul.f32 %v724, %v739
  %v800 = vmul.f32 %v725, %v735
  %v801 = vmul.f32 %v726, %v739
  %v802 = vmul.f32 %v727, %v735
  %v803 = vmul.f32 %v728, %v739
  %v804 = vmul.f32 %v729, %v735
  %v805 = vmul.f32 %v730, %v739
  %v806 = vld [vmem:[%s4] sm:$0xff]
  %v807 = vld [vmem:[%s4 + $0x8] sm:$0xff]
  %v808 = vld [vmem:[%s4 + $0x10] sm:$0xff]
  %v809 = vld [vmem:[%s4 + $0x18] sm:$0xff]
  %v810 = vld [vmem:[%s4 + $0x20] sm:$0xff]
  %v811 = vld [vmem:[%s4 + $0x28] sm:$0xff]
  %v812 = vld [vmem:[%s4 + $0x30] sm:$0xff]
  %v813 = vld [vmem:[%s4 + $0x38] sm:$0xff]
  %v814 = vld [vmem:[%s4 + $0x40] sm:$0xff]
  %v815 = vld [vmem:[%s4 + $0x48] sm:$0xff]
  %v816 = vld [vmem:[%s4 + $0x50] sm:$0xff]
  %v817 = vld [vmem:[%s4 + $0x58] sm:$0xff]
  %v818 = vld [vmem:[%s4 + $0x60] sm:$0xff]
  %v819 = vld [vmem:[%s4 + $0x68] sm:$0xff]
  %v820 = vld [vmem:[%s4 + $0x70] sm:$0xff]
  %v821 = vld [vmem:[%s4 + $0x78] sm:$0xff]
  %v822 = vld [vmem:[%s4 + $0x80] sm:$0xff]
  %v823 = vld [vmem:[%s4 + $0x88] sm:$0xff]
  %v824 = vld [vmem:[%s4 + $0x90] sm:$0xff]
  %v825 = vld [vmem:[%s4 + $0x98] sm:$0xff]
  %v826 = vld [vmem:[%s4 + $0xa0] sm:$0xff]
  %v827 = vld [vmem:[%s4 + $0xa8] sm:$0xff]
  %v828 = vld [vmem:[%s4 + $0xb0] sm:$0xff]
  %v829 = vld [vmem:[%s4 + $0xb8] sm:$0xff]
  %v830 = vld [vmem:[%s4 + $0xc0] sm:$0xff]
  %v831 = vld [vmem:[%s4 + $0xc8] sm:$0xff]
  %v832 = vld [vmem:[%s4 + $0xd0] sm:$0xff]
  %v833 = vld [vmem:[%s4 + $0xd8] sm:$0xff]
  %v834 = vld [vmem:[%s4 + $0xe0] sm:$0xff]
  %v835 = vld [vmem:[%s4 + $0xe8] sm:$0xff]
  %v836 = vld [vmem:[%s4 + $0xf0] sm:$0xff]
  %v837 = vld [vmem:[%s4 + $0xf8] sm:$0xff]
  %v838 = vld [vmem:[%s5] sm:$0x3]
  %839 = vset.pattern.permute.xlu0 0
  %840 = vperm.xlu0 %839, %v806
  %v841 = vpop.permute.xlu0 %840
  %842 = vset.pattern.permute.xlu0 0
  %843 = vperm.xlu0 %842, %v807
  %v844 = vpop.permute.xlu0 %843
  %845 = vset.pattern.permute.xlu0 0
  %846 = vperm.xlu0 %845, %v808
  %v847 = vpop.permute.xlu0 %846
  %848 = vset.pattern.permute.xlu0 0
  %849 = vperm.xlu0 %848, %v809
  %v850 = vpop.permute.xlu0 %849
  %851 = vset.pattern.permute.xlu0 0
  %852 = vperm.xlu0 %851, %v810
  %v853 = vpop.permute.xlu0 %852
  %854 = vset.pattern.permute.xlu0 0
  %855 = vperm.xlu0 %854, %v811
  %v856 = vpop.permute.xlu0 %855
  %857 = vset.pattern.permute.xlu0 0
  %858 = vperm.xlu0 %857, %v812
  %v859 = vpop.permute.xlu0 %858
  %860 = vset.pattern.permute.xlu0 0
  %861 = vperm.xlu0 %860, %v813
  %v862 = vpop.permute.xlu0 %861
  %863 = vset.pattern.permute.xlu0 0
  %864 = vperm.xlu0 %863, %v814
  %v865 = vpop.permute.xlu0 %864
  %866 = vset.pattern.permute.xlu0 0
  %867 = vperm.xlu0 %866, %v815
  %v868 = vpop.permute.xlu0 %867
  %869 = vset.pattern.permute.xlu0 0
  %870 = vperm.xlu0 %869, %v816
  %v871 = vpop.permute.xlu0 %870
  %872 = vset.pattern.permute.xlu0 0
  %873 = vperm.xlu0 %872, %v817
  %v874 = vpop.permute.xlu0 %873
  %875 = vset.pattern.permute.xlu0 0
  %876 = vperm.xlu0 %875, %v818
  %v877 = vpop.permute.xlu0 %876
  %878 = vset.pattern.permute.xlu0 0
  %879 = vperm.xlu0 %878, %v819
  %v880 = vpop.permute.xlu0 %879
  %881 = vset.pattern.permute.xlu0 0
  %882 = vperm.xlu0 %881, %v820
  %v883 = vpop.permute.xlu0 %882
  %884 = vset.pattern.permute.xlu0 0
  %885 = vperm.xlu0 %884, %v821
  %v886 = vpop.permute.xlu0 %885
  %887 = vset.pattern.permute.xlu0 0
  %888 = vperm.xlu0 %887, %v822
  %v889 = vpop.permute.xlu0 %888
  %890 = vset.pattern.permute.xlu0 0
  %891 = vperm.xlu0 %890, %v823
  %v892 = vpop.permute.xlu0 %891
  %893 = vset.pattern.permute.xlu0 0
  %894 = vperm.xlu0 %893, %v824
  %v895 = vpop.permute.xlu0 %894
  %896 = vset.pattern.permute.xlu0 0
  %897 = vperm.xlu0 %896, %v825
  %v898 = vpop.permute.xlu0 %897
  %899 = vset.pattern.permute.xlu0 0
  %900 = vperm.xlu0 %899, %v826
  %v901 = vpop.permute.xlu0 %900
  %902 = vset.pattern.permute.xlu0 0
  %903 = vperm.xlu0 %902, %v827
  %v904 = vpop.permute.xlu0 %903
  %905 = vset.pattern.permute.xlu0 0
  %906 = vperm.xlu0 %905, %v828
  %v907 = vpop.permute.xlu0 %906
  %908 = vset.pattern.permute.xlu0 0
  %909 = vperm.xlu0 %908, %v829
  %v910 = vpop.permute.xlu0 %909
  %911 = vset.pattern.permute.xlu0 0
  %912 = vperm.xlu0 %911, %v830
  %v913 = vpop.permute.xlu0 %912
  %914 = vset.pattern.permute.xlu0 0
  %915 = vperm.xlu0 %914, %v831
  %v916 = vpop.permute.xlu0 %915
  %917 = vset.pattern.permute.xlu0 0
  %918 = vperm.xlu0 %917, %v832
  %v919 = vpop.permute.xlu0 %918
  %920 = vset.pattern.permute.xlu0 0
  %921 = vperm.xlu0 %920, %v833
  %v922 = vpop.permute.xlu0 %921
  %923 = vset.pattern.permute.xlu0 0
  %924 = vperm.xlu0 %923, %v834
  %v925 = vpop.permute.xlu0 %924
  %926 = vset.pattern.permute.xlu0 0
  %927 = vperm.xlu0 %926, %v835
  %v928 = vpop.permute.xlu0 %927
  %929 = vset.pattern.permute.xlu0 0
  %930 = vperm.xlu0 %929, %v836
  %v931 = vpop.permute.xlu0 %930
  %932 = vset.pattern.permute.xlu0 0
  %933 = vperm.xlu0 %932, %v837
  %v934 = vpop.permute.xlu0 %933
  %v935 = vlaneseq
  %v936 = vshrl.u32 %v935, 7
  %v937 = vsub.s32 0, %v936
  %v938 = vrot.slane %v838, %v937
  %v939 = vlaneseq
  %v940 = vshrl.u32 %v939, 7
  %v941 = vsub.s32 1, %v940
  %v942 = vrot.slane %v838, %v941
  %vm943 = vcmp.eq.s32.totalorder %v841, %v938
  %vm944 = vcmp.eq.s32.totalorder %v841, %v942
  %vm945 = vcmp.eq.s32.totalorder %v844, %v938
  %vm946 = vcmp.eq.s32.totalorder %v844, %v942
  %vm947 = vcmp.eq.s32.totalorder %v847, %v938
  %vm948 = vcmp.eq.s32.totalorder %v847, %v942
  %vm949 = vcmp.eq.s32.totalorder %v850, %v938
  %vm950 = vcmp.eq.s32.totalorder %v850, %v942
  %vm951 = vcmp.eq.s32.totalorder %v853, %v938
  %vm952 = vcmp.eq.s32.totalorder %v853, %v942
  %vm953 = vcmp.eq.s32.totalorder %v856, %v938
  %vm954 = vcmp.eq.s32.totalorder %v856, %v942
  %vm955 = vcmp.eq.s32.totalorder %v859, %v938
  %vm956 = vcmp.eq.s32.totalorder %v859, %v942
  %vm957 = vcmp.eq.s32.totalorder %v862, %v938
  %vm958 = vcmp.eq.s32.totalorder %v862, %v942
  %vm959 = vcmp.eq.s32.totalorder %v865, %v938
  %vm960 = vcmp.eq.s32.totalorder %v865, %v942
  %vm961 = vcmp.eq.s32.totalorder %v868, %v938
  %vm962 = vcmp.eq.s32.totalorder %v868, %v942
  %vm963 = vcmp.eq.s32.totalorder %v871, %v938
  %vm964 = vcmp.eq.s32.totalorder %v871, %v942
  %vm965 = vcmp.eq.s32.totalorder %v874, %v938
  %vm966 = vcmp.eq.s32.totalorder %v874, %v942
  %vm967 = vcmp.eq.s32.totalorder %v877, %v938
  %vm968 = vcmp.eq.s32.totalorder %v877, %v942
  %vm969 = vcmp.eq.s32.totalorder %v880, %v938
  %vm970 = vcmp.eq.s32.totalorder %v880, %v942
  %vm971 = vcmp.eq.s32.totalorder %v883, %v938
  %vm972 = vcmp.eq.s32.totalorder %v883, %v942
  %vm973 = vcmp.eq.s32.totalorder %v886, %v938
  %vm974 = vcmp.eq.s32.totalorder %v886, %v942
  %vm975 = vcmp.eq.s32.totalorder %v889, %v938
  %vm976 = vcmp.eq.s32.totalorder %v889, %v942
  %vm977 = vcmp.eq.s32.totalorder %v892, %v938
  %vm978 = vcmp.eq.s32.totalorder %v892, %v942
  %vm979 = vcmp.eq.s32.totalorder %v895, %v938
  %vm980 = vcmp.eq.s32.totalorder %v895, %v942
  %vm981 = vcmp.eq.s32.totalorder %v898, %v938
  %vm982 = vcmp.eq.s32.totalorder %v898, %v942
  %vm983 = vcmp.eq.s32.totalorder %v901, %v938
  %vm984 = vcmp.eq.s32.totalorder %v901, %v942
  %vm985 = vcmp.eq.s32.totalorder %v904, %v938
  %vm986 = vcmp.eq.s32.totalorder %v904, %v942
  %vm987 = vcmp.eq.s32.totalorder %v907, %v938
  %vm988 = vcmp.eq.s32.totalorder %v907, %v942
  %vm989 = vcmp.eq.s32.totalorder %v910, %v938
  %vm990 = vcmp.eq.s32.totalorder %v910, %v942
  %vm991 = vcmp.eq.s32.totalorder %v913, %v938
  %vm992 = vcmp.eq.s32.totalorder %v913, %v942
  %vm993 = vcmp.eq.s32.totalorder %v916, %v938
  %vm994 = vcmp.eq.s32.totalorder %v916, %v942
  %vm995 = vcmp.eq.s32.totalorder %v919, %v938
  %vm996 = vcmp.eq.s32.totalorder %v919, %v942
  %vm997 = vcmp.eq.s32.totalorder %v922, %v938
  %vm998 = vcmp.eq.s32.totalorder %v922, %v942
  %vm999 = vcmp.eq.s32.totalorder %v925, %v938
  %vm1000 = vcmp.eq.s32.totalorder %v925, %v942
  %vm1001 = vcmp.eq.s32.totalorder %v928, %v938
  %vm1002 = vcmp.eq.s32.totalorder %v928, %v942
  %vm1003 = vcmp.eq.s32.totalorder %v931, %v938
  %vm1004 = vcmp.eq.s32.totalorder %v931, %v942
  %vm1005 = vcmp.eq.s32.totalorder %v934, %v938
  %vm1006 = vcmp.eq.s32.totalorder %v934, %v942
  %vm1007 = vcmp.ge.s32.totalorder %v838, 0
  %vm1008 = vcmp.ge.s32.totalorder %v806, 0
  %vm1009 = vcmp.ge.s32.totalorder %v807, 0
  %vm1010 = vcmp.ge.s32.totalorder %v808, 0
  %vm1011 = vcmp.ge.s32.totalorder %v809, 0
  %vm1012 = vcmp.ge.s32.totalorder %v810, 0
  %vm1013 = vcmp.ge.s32.totalorder %v811, 0
  %vm1014 = vcmp.ge.s32.totalorder %v812, 0
  %vm1015 = vcmp.ge.s32.totalorder %v813, 0
  %vm1016 = vcmp.ge.s32.totalorder %v814, 0
  %vm1017 = vcmp.ge.s32.totalorder %v815, 0
  %vm1018 = vcmp.ge.s32.totalorder %v816, 0
  %vm1019 = vcmp.ge.s32.totalorder %v817, 0
  %vm1020 = vcmp.ge.s32.totalorder %v818, 0
  %vm1021 = vcmp.ge.s32.totalorder %v819, 0
  %vm1022 = vcmp.ge.s32.totalorder %v820, 0
  %vm1023 = vcmp.ge.s32.totalorder %v821, 0
  %vm1024 = vcmp.ge.s32.totalorder %v822, 0
  %vm1025 = vcmp.ge.s32.totalorder %v823, 0
  %vm1026 = vcmp.ge.s32.totalorder %v824, 0
  %vm1027 = vcmp.ge.s32.totalorder %v825, 0
  %vm1028 = vcmp.ge.s32.totalorder %v826, 0
  %vm1029 = vcmp.ge.s32.totalorder %v827, 0
  %vm1030 = vcmp.ge.s32.totalorder %v828, 0
  %vm1031 = vcmp.ge.s32.totalorder %v829, 0
  %vm1032 = vcmp.ge.s32.totalorder %v830, 0
  %vm1033 = vcmp.ge.s32.totalorder %v831, 0
  %vm1034 = vcmp.ge.s32.totalorder %v832, 0
  %vm1035 = vcmp.ge.s32.totalorder %v833, 0
  %vm1036 = vcmp.ge.s32.totalorder %v834, 0
  %vm1037 = vcmp.ge.s32.totalorder %v835, 0
  %vm1038 = vcmp.ge.s32.totalorder %v836, 0
  %vm1039 = vcmp.ge.s32.totalorder %v837, 0
  %v1040 = vlaneseq
  %v1041 = vand.u32 %v1040, 127
  %v1042 = vadd.s32 %v1041, 128
  %v1043 = vlaneseq
  %v1044 = vshrl.u32 %v1043, 7
  %v1045 = vadd.s32 %v1044, 8
  %v1046 = vadd.s32 %v1044, 16
  %v1047 = vadd.s32 %v1044, 24
  %v1048 = vadd.s32 %v1044, 32
  %v1049 = vadd.s32 %v1044, 40
  %v1050 = vadd.s32 %v1044, 48
  %v1051 = vadd.s32 %v1044, 56
  %v1052 = vadd.s32 %v1044, 64
  %v1053 = vadd.s32 %v1044, 72
  %v1054 = vadd.s32 %v1044, 80
  %v1055 = vadd.s32 %v1044, 88
  %v1056 = vadd.s32 %v1044, 96
  %v1057 = vadd.s32 %v1044, 104
  %v1058 = vadd.s32 %v1044, 112
  %v1059 = vadd.s32 %v1044, 120
  %v1060 = vadd.s32 %v1044, 128
  %v1061 = vadd.s32 %v1044, 136
  %v1062 = vadd.s32 %v1044, 144
  %v1063 = vadd.s32 %v1044, 152
  %v1064 = vadd.s32 %v1044, 160
  %v1065 = vadd.s32 %v1044, 168
  %v1066 = vadd.s32 %v1044, 176
  %v1067 = vadd.s32 %v1044, 184
  %v1068 = vadd.s32 %v1044, 192
  %v1069 = vadd.s32 %v1044, 200
  %v1070 = vadd.s32 %v1044, 208
  %v1071 = vadd.s32 %v1044, 216
  %v1072 = vadd.s32 %v1044, 224
  %v1073 = vadd.s32 %v1044, 232
  %v1074 = vadd.s32 %v1044, 240
  %v1075 = vadd.s32 %v1044, 248
  %v1076 = vstv %s24
  %v1077 = vadd.s32 %v1044, %v1076
  %v1078 = vadd.s32 %v1045, %v1076
  %v1079 = vadd.s32 %v1046, %v1076
  %v1080 = vadd.s32 %v1047, %v1076
  %v1081 = vadd.s32 %v1048, %v1076
  %v1082 = vadd.s32 %v1049, %v1076
  %v1083 = vadd.s32 %v1050, %v1076
  %v1084 = vadd.s32 %v1051, %v1076
  %v1085 = vadd.s32 %v1052, %v1076
  %v1086 = vadd.s32 %v1053, %v1076
  %v1087 = vadd.s32 %v1054, %v1076
  %v1088 = vadd.s32 %v1055, %v1076
  %v1089 = vadd.s32 %v1056, %v1076
  %v1090 = vadd.s32 %v1057, %v1076
  %v1091 = vadd.s32 %v1058, %v1076
  %v1092 = vadd.s32 %v1059, %v1076
  %v1093 = vadd.s32 %v1060, %v1076
  %v1094 = vadd.s32 %v1061, %v1076
  %v1095 = vadd.s32 %v1062, %v1076
  %v1096 = vadd.s32 %v1063, %v1076
  %v1097 = vadd.s32 %v1064, %v1076
  %v1098 = vadd.s32 %v1065, %v1076
  %v1099 = vadd.s32 %v1066, %v1076
  %v1100 = vadd.s32 %v1067, %v1076
  %v1101 = vadd.s32 %v1068, %v1076
  %v1102 = vadd.s32 %v1069, %v1076
  %v1103 = vadd.s32 %v1070, %v1076
  %v1104 = vadd.s32 %v1071, %v1076
  %v1105 = vadd.s32 %v1072, %v1076
  %v1106 = vadd.s32 %v1073, %v1076
  %v1107 = vadd.s32 %v1074, %v1076
  %v1108 = vadd.s32 %v1075, %v1076
  %vm1109 = vcmp.ne.s32.totalorder %v1077, %v1041
  %vm1110 = vcmp.ne.s32.totalorder %v1077, %v1042
  %vm1111 = vcmp.ne.s32.totalorder %v1078, %v1041
  %vm1112 = vcmp.ne.s32.totalorder %v1078, %v1042
  %vm1113 = vcmp.ne.s32.totalorder %v1079, %v1041
  %vm1114 = vcmp.ne.s32.totalorder %v1079, %v1042
  %vm1115 = vcmp.ne.s32.totalorder %v1080, %v1041
  %vm1116 = vcmp.ne.s32.totalorder %v1080, %v1042
  %vm1117 = vcmp.ne.s32.totalorder %v1081, %v1041
  %vm1118 = vcmp.ne.s32.totalorder %v1081, %v1042
  %vm1119 = vcmp.ne.s32.totalorder %v1082, %v1041
  %vm1120 = vcmp.ne.s32.totalorder %v1082, %v1042
  %vm1121 = vcmp.ne.s32.totalorder %v1083, %v1041
  %vm1122 = vcmp.ne.s32.totalorder %v1083, %v1042
  %vm1123 = vcmp.ne.s32.totalorder %v1084, %v1041
  %vm1124 = vcmp.ne.s32.totalorder %v1084, %v1042
  %vm1125 = vcmp.ne.s32.totalorder %v1085, %v1041
  %vm1126 = vcmp.ne.s32.totalorder %v1085, %v1042
  %vm1127 = vcmp.ne.s32.totalorder %v1086, %v1041
  %vm1128 = vcmp.ne.s32.totalorder %v1086, %v1042
  %vm1129 = vcmp.ne.s32.totalorder %v1087, %v1041
  %vm1130 = vcmp.ne.s32.totalorder %v1087, %v1042
  %vm1131 = vcmp.ne.s32.totalorder %v1088, %v1041
  %vm1132 = vcmp.ne.s32.totalorder %v1088, %v1042
  %vm1133 = vcmp.ne.s32.totalorder %v1089, %v1041
  %vm1134 = vcmp.ne.s32.totalorder %v1089, %v1042
  %vm1135 = vcmp.ne.s32.totalorder %v1090, %v1041
  %vm1136 = vcmp.ne.s32.totalorder %v1090, %v1042
  %vm1137 = vcmp.ne.s32.totalorder %v1091, %v1041
  %vm1138 = vcmp.ne.s32.totalorder %v1091, %v1042
  %vm1139 = vcmp.ne.s32.totalorder %v1092, %v1041
  %vm1140 = vcmp.ne.s32.totalorder %v1092, %v1042
  %vm1141 = vcmp.ne.s32.totalorder %v1093, %v1041
  %vm1142 = vcmp.ne.s32.totalorder %v1093, %v1042
  %vm1143 = vcmp.ne.s32.totalorder %v1094, %v1041
  %vm1144 = vcmp.ne.s32.totalorder %v1094, %v1042
  %vm1145 = vcmp.ne.s32.totalorder %v1095, %v1041
  %vm1146 = vcmp.ne.s32.totalorder %v1095, %v1042
  %vm1147 = vcmp.ne.s32.totalorder %v1096, %v1041
  %vm1148 = vcmp.ne.s32.totalorder %v1096, %v1042
  %vm1149 = vcmp.ne.s32.totalorder %v1097, %v1041
  %vm1150 = vcmp.ne.s32.totalorder %v1097, %v1042
  %vm1151 = vcmp.ne.s32.totalorder %v1098, %v1041
  %vm1152 = vcmp.ne.s32.totalorder %v1098, %v1042
  %vm1153 = vcmp.ne.s32.totalorder %v1099, %v1041
  %vm1154 = vcmp.ne.s32.totalorder %v1099, %v1042
  %vm1155 = vcmp.ne.s32.totalorder %v1100, %v1041
  %vm1156 = vcmp.ne.s32.totalorder %v1100, %v1042
  %vm1157 = vcmp.ne.s32.totalorder %v1101, %v1041
  %vm1158 = vcmp.ne.s32.totalorder %v1101, %v1042
  %vm1159 = vcmp.ne.s32.totalorder %v1102, %v1041
  %vm1160 = vcmp.ne.s32.totalorder %v1102, %v1042
  %vm1161 = vcmp.ne.s32.totalorder %v1103, %v1041
  %vm1162 = vcmp.ne.s32.totalorder %v1103, %v1042
  %vm1163 = vcmp.ne.s32.totalorder %v1104, %v1041
  %vm1164 = vcmp.ne.s32.totalorder %v1104, %v1042
  %vm1165 = vcmp.ne.s32.totalorder %v1105, %v1041
  %vm1166 = vcmp.ne.s32.totalorder %v1105, %v1042
  %vm1167 = vcmp.ne.s32.totalorder %v1106, %v1041
  %vm1168 = vcmp.ne.s32.totalorder %v1106, %v1042
  %vm1169 = vcmp.ne.s32.totalorder %v1107, %v1041
  %vm1170 = vcmp.ne.s32.totalorder %v1107, %v1042
  %vm1171 = vcmp.ne.s32.totalorder %v1108, %v1041
  %vm1172 = vcmp.ne.s32.totalorder %v1108, %v1042
  %v1173 = vmax.f32 %v742, %v743
  %1174 = vmax.xlane.f32.xlu0 %v1173
  %v1175 = vpop.xlane.xlu0 %1174
  %v1176 = vmax.f32 %v744, %v745
  %1177 = vmax.xlane.f32.xlu0 %v1176
  %v1178 = vpop.xlane.xlu0 %1177
  %v1179 = vmax.f32 %v746, %v747
  %1180 = vmax.xlane.f32.xlu0 %v1179
  %v1181 = vpop.xlane.xlu0 %1180
  %v1182 = vmax.f32 %v748, %v749
  %1183 = vmax.xlane.f32.xlu0 %v1182
  %v1184 = vpop.xlane.xlu0 %1183
  %v1185 = vmax.f32 %v750, %v751
  %1186 = vmax.xlane.f32.xlu0 %v1185
  %v1187 = vpop.xlane.xlu0 %1186
  %v1188 = vmax.f32 %v752, %v753
  %1189 = vmax.xlane.f32.xlu0 %v1188
  %v1190 = vpop.xlane.xlu0 %1189
  %v1191 = vmax.f32 %v754, %v755
  %1192 = vmax.xlane.f32.xlu0 %v1191
  %v1193 = vpop.xlane.xlu0 %1192
  %v1194 = vmax.f32 %v756, %v757
  %1195 = vmax.xlane.f32.xlu0 %v1194
  %v1196 = vpop.xlane.xlu0 %1195
  %v1197 = vmax.f32 %v758, %v759
  %1198 = vmax.xlane.f32.xlu0 %v1197
  %v1199 = vpop.xlane.xlu0 %1198
  %v1200 = vmax.f32 %v760, %v761
  %1201 = vmax.xlane.f32.xlu0 %v1200
  %v1202 = vpop.xlane.xlu0 %1201
  %v1203 = vmax.f32 %v762, %v763
  %1204 = vmax.xlane.f32.xlu0 %v1203
  %v1205 = vpop.xlane.xlu0 %1204
  %v1206 = vmax.f32 %v764, %v765
  %1207 = vmax.xlane.f32.xlu0 %v1206
  %v1208 = vpop.xlane.xlu0 %1207
  %v1209 = vmax.f32 %v766, %v767
  %1210 = vmax.xlane.f32.xlu0 %v1209
  %v1211 = vpop.xlane.xlu0 %1210
  %v1212 = vmax.f32 %v768, %v769
  %1213 = vmax.xlane.f32.xlu0 %v1212
  %v1214 = vpop.xlane.xlu0 %1213
  %v1215 = vmax.f32 %v770, %v771
  %1216 = vmax.xlane.f32.xlu0 %v1215
  %v1217 = vpop.xlane.xlu0 %1216
  %v1218 = vmax.f32 %v772, %v773
  %1219 = vmax.xlane.f32.xlu0 %v1218
  %v1220 = vpop.xlane.xlu0 %1219
  %v1221 = vmax.f32 %v774, %v775
  %1222 = vmax.xlane.f32.xlu0 %v1221
  %v1223 = vpop.xlane.xlu0 %1222
  %v1224 = vmax.f32 %v776, %v777
  %1225 = vmax.xlane.f32.xlu0 %v1224
  %v1226 = vpop.xlane.xlu0 %1225
  %v1227 = vmax.f32 %v778, %v779
  %1228 = vmax.xlane.f32.xlu0 %v1227
  %v1229 = vpop.xlane.xlu0 %1228
  %v1230 = vmax.f32 %v780, %v781
  %1231 = vmax.xlane.f32.xlu0 %v1230
  %v1232 = vpop.xlane.xlu0 %1231
  %v1233 = vmax.f32 %v782, %v783
  %1234 = vmax.xlane.f32.xlu0 %v1233
  %v1235 = vpop.xlane.xlu0 %1234
  %v1236 = vmax.f32 %v784, %v785
  %1237 = vmax.xlane.f32.xlu0 %v1236
  %v1238 = vpop.xlane.xlu0 %1237
  %v1239 = vmax.f32 %v786, %v787
  %1240 = vmax.xlane.f32.xlu0 %v1239
  %v1241 = vpop.xlane.xlu0 %1240
  %v1242 = vmax.f32 %v788, %v789
  %1243 = vmax.xlane.f32.xlu0 %v1242
  %v1244 = vpop.xlane.xlu0 %1243
  %v1245 = vmax.f32 %v790, %v791
  %1246 = vmax.xlane.f32.xlu0 %v1245
  %v1247 = vpop.xlane.xlu0 %1246
  %v1248 = vmax.f32 %v792, %v793
  %1249 = vmax.xlane.f32.xlu0 %v1248
  %v1250 = vpop.xlane.xlu0 %1249
  %v1251 = vmax.f32 %v794, %v795
  %1252 = vmax.xlane.f32.xlu0 %v1251
  %v1253 = vpop.xlane.xlu0 %1252
  %v1254 = vmax.f32 %v796, %v797
  %1255 = vmax.xlane.f32.xlu0 %v1254
  %v1256 = vpop.xlane.xlu0 %1255
  %v1257 = vmax.f32 %v798, %v799
  %1258 = vmax.xlane.f32.xlu0 %v1257
  %v1259 = vpop.xlane.xlu0 %1258
  %v1260 = vmax.f32 %v800, %v801
  %1261 = vmax.xlane.f32.xlu0 %v1260
  %v1262 = vpop.xlane.xlu0 %1261
  %v1263 = vmax.f32 %v802, %v803
  %1264 = vmax.xlane.f32.xlu0 %v1263
  %v1265 = vpop.xlane.xlu0 %1264
  %v1266 = vmax.f32 %v804, %v805
  %1267 = vmax.xlane.f32.xlu0 %v1266
  %v1268 = vpop.xlane.xlu0 %1267
  %v1269 = vsub.f32 %v742, %v1175
  %v1270 = vsub.f32 %v743, %v1175
  %v1271 = vsub.f32 %v744, %v1178
  %v1272 = vsub.f32 %v745, %v1178
  %v1273 = vsub.f32 %v746, %v1181
  %v1274 = vsub.f32 %v747, %v1181
  %v1275 = vsub.f32 %v748, %v1184
  %v1276 = vsub.f32 %v749, %v1184
  %v1277 = vsub.f32 %v750, %v1187
  %v1278 = vsub.f32 %v751, %v1187
  %v1279 = vsub.f32 %v752, %v1190
  %v1280 = vsub.f32 %v753, %v1190
  %v1281 = vsub.f32 %v754, %v1193
  %v1282 = vsub.f32 %v755, %v1193
  %v1283 = vsub.f32 %v756, %v1196
  %v1284 = vsub.f32 %v757, %v1196
  %v1285 = vsub.f32 %v758, %v1199
  %v1286 = vsub.f32 %v759, %v1199
  %v1287 = vsub.f32 %v760, %v1202
  %v1288 = vsub.f32 %v761, %v1202
  %v1289 = vsub.f32 %v762, %v1205
  %v1290 = vsub.f32 %v763, %v1205
  %v1291 = vsub.f32 %v764, %v1208
  %v1292 = vsub.f32 %v765, %v1208
  %v1293 = vsub.f32 %v766, %v1211
  %v1294 = vsub.f32 %v767, %v1211
  %v1295 = vsub.f32 %v768, %v1214
  %v1296 = vsub.f32 %v769, %v1214
  %v1297 = vsub.f32 %v770, %v1217
  %v1298 = vsub.f32 %v771, %v1217
  %v1299 = vsub.f32 %v772, %v1220
  %v1300 = vsub.f32 %v773, %v1220
  %v1301 = vsub.f32 %v774, %v1223
  %v1302 = vsub.f32 %v775, %v1223
  %v1303 = vsub.f32 %v776, %v1226
  %v1304 = vsub.f32 %v777, %v1226
  %v1305 = vsub.f32 %v778, %v1229
  %v1306 = vsub.f32 %v779, %v1229
  %v1307 = vsub.f32 %v780, %v1232
  %v1308 = vsub.f32 %v781, %v1232
  %v1309 = vsub.f32 %v782, %v1235
  %v1310 = vsub.f32 %v783, %v1235
  %v1311 = vsub.f32 %v784, %v1238
  %v1312 = vsub.f32 %v785, %v1238
  %v1313 = vsub.f32 %v786, %v1241
  %v1314 = vsub.f32 %v787, %v1241
  %v1315 = vsub.f32 %v788, %v1244
  %v1316 = vsub.f32 %v789, %v1244
  %v1317 = vsub.f32 %v790, %v1247
  %v1318 = vsub.f32 %v791, %v1247
  %v1319 = vsub.f32 %v792, %v1250
  %v1320 = vsub.f32 %v793, %v1250
  %v1321 = vsub.f32 %v794, %v1253
  %v1322 = vsub.f32 %v795, %v1253
  %v1323 = vsub.f32 %v796, %v1256
  %v1324 = vsub.f32 %v797, %v1256
  %v1325 = vsub.f32 %v798, %v1259
  %v1326 = vsub.f32 %v799, %v1259
  %v1327 = vsub.f32 %v800, %v1262
  %v1328 = vsub.f32 %v801, %v1262
  %v1329 = vsub.f32 %v802, %v1265
  %v1330 = vsub.f32 %v803, %v1265
  %v1331 = vsub.f32 %v804, %v1268
  %v1332 = vsub.f32 %v805, %v1268
  %v1333 = vmul.f32 %v1269, 1.442695
  %v1334 = vpow.pop %v1333
  %v1335 = vmul.f32 %v1270, 1.442695
  %v1336 = vpow.pop %v1335
  %v1337 = vmul.f32 %v1271, 1.442695
  %v1338 = vpow.pop %v1337
  %v1339 = vmul.f32 %v1272, 1.442695
  %v1340 = vpow.pop %v1339
  %v1341 = vmul.f32 %v1273, 1.442695
  %v1342 = vpow.pop %v1341
  %v1343 = vmul.f32 %v1274, 1.442695
  %v1344 = vpow.pop %v1343
  %v1345 = vmul.f32 %v1275, 1.442695
  %v1346 = vpow.pop %v1345
  %v1347 = vmul.f32 %v1276, 1.442695
  %v1348 = vpow.pop %v1347
  %v1349 = vmul.f32 %v1277, 1.442695
  %v1350 = vpow.pop %v1349
  %v1351 = vmul.f32 %v1278, 1.442695
  %v1352 = vpow.pop %v1351
  %v1353 = vmul.f32 %v1279, 1.442695
  %v1354 = vpow.pop %v1353
  %v1355 = vmul.f32 %v1280, 1.442695
  %v1356 = vpow.pop %v1355
  %v1357 = vmul.f32 %v1281, 1.442695
  %v1358 = vpow.pop %v1357
  %v1359 = vmul.f32 %v1282, 1.442695
  %v1360 = vpow.pop %v1359
  %v1361 = vmul.f32 %v1283, 1.442695
  %v1362 = vpow.pop %v1361
  %v1363 = vmul.f32 %v1284, 1.442695
  %v1364 = vpow.pop %v1363
  %v1365 = vmul.f32 %v1285, 1.442695
  %v1366 = vpow.pop %v1365
  %v1367 = vmul.f32 %v1286, 1.442695
  %v1368 = vpow.pop %v1367
  %v1369 = vmul.f32 %v1287, 1.442695
  %v1370 = vpow.pop %v1369
  %v1371 = vmul.f32 %v1288, 1.442695
  %v1372 = vpow.pop %v1371
  %v1373 = vmul.f32 %v1289, 1.442695
  %v1374 = vpow.pop %v1373
  %v1375 = vmul.f32 %v1290, 1.442695
  %v1376 = vpow.pop %v1375
  %v1377 = vmul.f32 %v1291, 1.442695
  %v1378 = vpow.pop %v1377
  %v1379 = vmul.f32 %v1292, 1.442695
  %v1380 = vpow.pop %v1379
  %v1381 = vmul.f32 %v1293, 1.442695
  %v1382 = vpow.pop %v1381
  %v1383 = vmul.f32 %v1294, 1.442695
  %v1384 = vpow.pop %v1383
  %v1385 = vmul.f32 %v1295, 1.442695
  %v1386 = vpow.pop %v1385
  %v1387 = vmul.f32 %v1296, 1.442695
  %v1388 = vpow.pop %v1387
  %v1389 = vmul.f32 %v1297, 1.442695
  %v1390 = vpow.pop %v1389
  %v1391 = vmul.f32 %v1298, 1.442695
  %v1392 = vpow.pop %v1391
  %v1393 = vmul.f32 %v1299, 1.442695
  %v1394 = vpow.pop %v1393
  %v1395 = vmul.f32 %v1300, 1.442695
  %v1396 = vpow.pop %v1395
  %v1397 = vmul.f32 %v1301, 1.442695
  %v1398 = vpow.pop %v1397
  %v1399 = vmul.f32 %v1302, 1.442695
  %v1400 = vpow.pop %v1399
  %v1401 = vmul.f32 %v1303, 1.442695
  %v1402 = vpow.pop %v1401
  %v1403 = vmul.f32 %v1304, 1.442695
  %v1404 = vpow.pop %v1403
  %v1405 = vmul.f32 %v1305, 1.442695
  %v1406 = vpow.pop %v1405
  %v1407 = vmul.f32 %v1306, 1.442695
  %v1408 = vpow.pop %v1407
  %v1409 = vmul.f32 %v1307, 1.442695
  %v1410 = vpow.pop %v1409
  %v1411 = vmul.f32 %v1308, 1.442695
  %v1412 = vpow.pop %v1411
  %v1413 = vmul.f32 %v1309, 1.442695
  %v1414 = vpow.pop %v1413
  %v1415 = vmul.f32 %v1310, 1.442695
  %v1416 = vpow.pop %v1415
  %v1417 = vmul.f32 %v1311, 1.442695
  %v1418 = vpow.pop %v1417
  %v1419 = vmul.f32 %v1312, 1.442695
  %v1420 = vpow.pop %v1419
  %v1421 = vmul.f32 %v1313, 1.442695
  %v1422 = vpow.pop %v1421
  %v1423 = vmul.f32 %v1314, 1.442695
  %v1424 = vpow.pop %v1423
  %v1425 = vmul.f32 %v1315, 1.442695
  %v1426 = vpow.pop %v1425
  %v1427 = vmul.f32 %v1316, 1.442695
  %v1428 = vpow.pop %v1427
  %v1429 = vmul.f32 %v1317, 1.442695
  %v1430 = vpow.pop %v1429
  %v1431 = vmul.f32 %v1318, 1.442695
  %v1432 = vpow.pop %v1431
  %v1433 = vmul.f32 %v1319, 1.442695
  %v1434 = vpow.pop %v1433
  %v1435 = vmul.f32 %v1320, 1.442695
  %v1436 = vpow.pop %v1435
  %v1437 = vmul.f32 %v1321, 1.442695
  %v1438 = vpow.pop %v1437
  %v1439 = vmul.f32 %v1322, 1.442695
  %v1440 = vpow.pop %v1439
  %v1441 = vmul.f32 %v1323, 1.442695
  %v1442 = vpow.pop %v1441
  %v1443 = vmul.f32 %v1324, 1.442695
  %v1444 = vpow.pop %v1443
  %v1445 = vmul.f32 %v1325, 1.442695
  %v1446 = vpow.pop %v1445
  %v1447 = vmul.f32 %v1326, 1.442695
  %v1448 = vpow.pop %v1447
  %v1449 = vmul.f32 %v1327, 1.442695
  %v1450 = vpow.pop %v1449
  %v1451 = vmul.f32 %v1328, 1.442695
  %v1452 = vpow.pop %v1451
  %v1453 = vmul.f32 %v1329, 1.442695
  %v1454 = vpow.pop %v1453
  %v1455 = vmul.f32 %v1330, 1.442695
  %v1456 = vpow.pop %v1455
  %v1457 = vmul.f32 %v1331, 1.442695
  %v1458 = vpow.pop %v1457
  %v1459 = vmul.f32 %v1332, 1.442695
  %v1460 = vpow.pop %v1459
  %vm1461 = vmxor %vm943, 1
  %vm1462 = vmxor %vm944, 1
  %vm1463 = vmxor %vm945, 1
  %vm1464 = vmxor %vm946, 1
  %vm1465 = vmxor %vm947, 1
  %vm1466 = vmxor %vm948, 1
  %vm1467 = vmxor %vm949, 1
  %vm1468 = vmxor %vm950, 1
  %vm1469 = vmxor %vm951, 1
  %vm1470 = vmxor %vm952, 1
  %vm1471 = vmxor %vm953, 1
  %vm1472 = vmxor %vm954, 1
  %vm1473 = vmxor %vm955, 1
  %vm1474 = vmxor %vm956, 1
  %vm1475 = vmxor %vm957, 1
  %vm1476 = vmxor %vm958, 1
  %vm1477 = vmxor %vm959, 1
  %vm1478 = vmxor %vm960, 1
  %vm1479 = vmxor %vm961, 1
  %vm1480 = vmxor %vm962, 1
  %vm1481 = vmxor %vm963, 1
  %vm1482 = vmxor %vm964, 1
  %vm1483 = vmxor %vm965, 1
  %vm1484 = vmxor %vm966, 1
  %vm1485 = vmxor %vm967, 1
  %vm1486 = vmxor %vm968, 1
  %vm1487 = vmxor %vm969, 1
  %vm1488 = vmxor %vm970, 1
  %vm1489 = vmxor %vm971, 1
  %vm1490 = vmxor %vm972, 1
  %vm1491 = vmxor %vm973, 1
  %vm1492 = vmxor %vm974, 1
  %vm1493 = vmxor %vm975, 1
  %vm1494 = vmxor %vm976, 1
  %vm1495 = vmxor %vm977, 1
  %vm1496 = vmxor %vm978, 1
  %vm1497 = vmxor %vm979, 1
  %vm1498 = vmxor %vm980, 1
  %vm1499 = vmxor %vm981, 1
  %vm1500 = vmxor %vm982, 1
  %vm1501 = vmxor %vm983, 1
  %vm1502 = vmxor %vm984, 1
  %vm1503 = vmxor %vm985, 1
  %vm1504 = vmxor %vm986, 1
  %vm1505 = vmxor %vm987, 1
  %vm1506 = vmxor %vm988, 1
  %vm1507 = vmxor %vm989, 1
  %vm1508 = vmxor %vm990, 1
  %vm1509 = vmxor %vm991, 1
  %vm1510 = vmxor %vm992, 1
  %vm1511 = vmxor %vm993, 1
  %vm1512 = vmxor %vm994, 1
  %vm1513 = vmxor %vm995, 1
  %vm1514 = vmxor %vm996, 1
  %vm1515 = vmxor %vm997, 1
  %vm1516 = vmxor %vm998, 1
  %vm1517 = vmxor %vm999, 1
  %vm1518 = vmxor %vm1000, 1
  %vm1519 = vmxor %vm1001, 1
  %vm1520 = vmxor %vm1002, 1
  %vm1521 = vmxor %vm1003, 1
  %vm1522 = vmxor %vm1004, 1
  %vm1523 = vmxor %vm1005, 1
  %vm1524 = vmxor %vm1006, 1
  %v1525 = vsel %vm1007, 1, 0
  %v1526 = vlaneseq
  %v1527 = vshrl.u32 %v1526, 7
  %v1528 = vsub.s32 0, %v1527
  %v1529 = vrot.slane %v1525, %v1528
  %v1530 = vlaneseq
  %v1531 = vshrl.u32 %v1530, 7
  %v1532 = vsub.s32 1, %v1531
  %v1533 = vrot.slane %v1525, %v1532
  %vm1534 = vcmp.eq.s32.totalorder %v1529, 1
  %vm1535 = vcmp.eq.s32.totalorder %v1533, 1
  %vm1536 = vmand %vm1461, %vm1534
  %vm1537 = vmand %vm1462, %vm1535
  %vm1538 = vmand %vm1463, %vm1534
  %vm1539 = vmand %vm1464, %vm1535
  %vm1540 = vmand %vm1465, %vm1534
  %vm1541 = vmand %vm1466, %vm1535
  %vm1542 = vmand %vm1467, %vm1534
  %vm1543 = vmand %vm1468, %vm1535
  %vm1544 = vmand %vm1469, %vm1534
  %vm1545 = vmand %vm1470, %vm1535
  %vm1546 = vmand %vm1471, %vm1534
  %vm1547 = vmand %vm1472, %vm1535
  %vm1548 = vmand %vm1473, %vm1534
  %vm1549 = vmand %vm1474, %vm1535
  %vm1550 = vmand %vm1475, %vm1534
  %vm1551 = vmand %vm1476, %vm1535
  %vm1552 = vmand %vm1477, %vm1534
  %vm1553 = vmand %vm1478, %vm1535
  %vm1554 = vmand %vm1479, %vm1534
  %vm1555 = vmand %vm1480, %vm1535
  %vm1556 = vmand %vm1481, %vm1534
  %vm1557 = vmand %vm1482, %vm1535
  %vm1558 = vmand %vm1483, %vm1534
  %vm1559 = vmand %vm1484, %vm1535
  %vm1560 = vmand %vm1485, %vm1534
  %vm1561 = vmand %vm1486, %vm1535
  %vm1562 = vmand %vm1487, %vm1534
  %vm1563 = vmand %vm1488, %vm1535
  %vm1564 = vmand %vm1489, %vm1534
  %vm1565 = vmand %vm1490, %vm1535
  %vm1566 = vmand %vm1491, %vm1534
  %vm1567 = vmand %vm1492, %vm1535
  %vm1568 = vmand %vm1493, %vm1534
  %vm1569 = vmand %vm1494, %vm1535
  %vm1570 = vmand %vm1495, %vm1534
  %vm1571 = vmand %vm1496, %vm1535
  %vm1572 = vmand %vm1497, %vm1534
  %vm1573 = vmand %vm1498, %vm1535
  %vm1574 = vmand %vm1499, %vm1534
  %vm1575 = vmand %vm1500, %vm1535
  %vm1576 = vmand %vm1501, %vm1534
  %vm1577 = vmand %vm1502, %vm1535
  %vm1578 = vmand %vm1503, %vm1534
  %vm1579 = vmand %vm1504, %vm1535
  %vm1580 = vmand %vm1505, %vm1534
  %vm1581 = vmand %vm1506, %vm1535
  %vm1582 = vmand %vm1507, %vm1534
  %vm1583 = vmand %vm1508, %vm1535
  %vm1584 = vmand %vm1509, %vm1534
  %vm1585 = vmand %vm1510, %vm1535
  %vm1586 = vmand %vm1511, %vm1534
  %vm1587 = vmand %vm1512, %vm1535
  %vm1588 = vmand %vm1513, %vm1534
  %vm1589 = vmand %vm1514, %vm1535
  %vm1590 = vmand %vm1515, %vm1534
  %vm1591 = vmand %vm1516, %vm1535
  %vm1592 = vmand %vm1517, %vm1534
  %vm1593 = vmand %vm1518, %vm1535
  %vm1594 = vmand %vm1519, %vm1534
  %vm1595 = vmand %vm1520, %vm1535
  %vm1596 = vmand %vm1521, %vm1534
  %vm1597 = vmand %vm1522, %vm1535
  %vm1598 = vmand %vm1523, %vm1534
  %vm1599 = vmand %vm1524, %vm1535
  %v1600 = vsel %vm1536, %v1334, 0.0
  %v1601 = vsel %vm1537, %v1336, 0.0
  %v1602 = vsel %vm1538, %v1338, 0.0
  %v1603 = vsel %vm1539, %v1340, 0.0
  %v1604 = vsel %vm1540, %v1342, 0.0
  %v1605 = vsel %vm1541, %v1344, 0.0
  %v1606 = vsel %vm1542, %v1346, 0.0
  %v1607 = vsel %vm1543, %v1348, 0.0
  %v1608 = vsel %vm1544, %v1350, 0.0
  %v1609 = vsel %vm1545, %v1352, 0.0
  %v1610 = vsel %vm1546, %v1354, 0.0
  %v1611 = vsel %vm1547, %v1356, 0.0
  %v1612 = vsel %vm1548, %v1358, 0.0
  %v1613 = vsel %vm1549, %v1360, 0.0
  %v1614 = vsel %vm1550, %v1362, 0.0
  %v1615 = vsel %vm1551, %v1364, 0.0
  %v1616 = vsel %vm1552, %v1366, 0.0
  %v1617 = vsel %vm1553, %v1368, 0.0
  %v1618 = vsel %vm1554, %v1370, 0.0
  %v1619 = vsel %vm1555, %v1372, 0.0
  %v1620 = vsel %vm1556, %v1374, 0.0
  %v1621 = vsel %vm1557, %v1376, 0.0
  %v1622 = vsel %vm1558, %v1378, 0.0
  %v1623 = vsel %vm1559, %v1380, 0.0
  %v1624 = vsel %vm1560, %v1382, 0.0
  %v1625 = vsel %vm1561, %v1384, 0.0
  %v1626 = vsel %vm1562, %v1386, 0.0
  %v1627 = vsel %vm1563, %v1388, 0.0
  %v1628 = vsel %vm1564, %v1390, 0.0
  %v1629 = vsel %vm1565, %v1392, 0.0
  %v1630 = vsel %vm1566, %v1394, 0.0
  %v1631 = vsel %vm1567, %v1396, 0.0
  %v1632 = vsel %vm1568, %v1398, 0.0
  %v1633 = vsel %vm1569, %v1400, 0.0
  %v1634 = vsel %vm1570, %v1402, 0.0
  %v1635 = vsel %vm1571, %v1404, 0.0
  %v1636 = vsel %vm1572, %v1406, 0.0
  %v1637 = vsel %vm1573, %v1408, 0.0
  %v1638 = vsel %vm1574, %v1410, 0.0
  %v1639 = vsel %vm1575, %v1412, 0.0
  %v1640 = vsel %vm1576, %v1414, 0.0
  %v1641 = vsel %vm1577, %v1416, 0.0
  %v1642 = vsel %vm1578, %v1418, 0.0
  %v1643 = vsel %vm1579, %v1420, 0.0
  %v1644 = vsel %vm1580, %v1422, 0.0
  %v1645 = vsel %vm1581, %v1424, 0.0
  %v1646 = vsel %vm1582, %v1426, 0.0
  %v1647 = vsel %vm1583, %v1428, 0.0
  %v1648 = vsel %vm1584, %v1430, 0.0
  %v1649 = vsel %vm1585, %v1432, 0.0
  %v1650 = vsel %vm1586, %v1434, 0.0
  %v1651 = vsel %vm1587, %v1436, 0.0
  %v1652 = vsel %vm1588, %v1438, 0.0
  %v1653 = vsel %vm1589, %v1440, 0.0
  %v1654 = vsel %vm1590, %v1442, 0.0
  %v1655 = vsel %vm1591, %v1444, 0.0
  %v1656 = vsel %vm1592, %v1446, 0.0
  %v1657 = vsel %vm1593, %v1448, 0.0
  %v1658 = vsel %vm1594, %v1450, 0.0
  %v1659 = vsel %vm1595, %v1452, 0.0
  %v1660 = vsel %vm1596, %v1454, 0.0
  %v1661 = vsel %vm1597, %v1456, 0.0
  %v1662 = vsel %vm1598, %v1458, 0.0
  %v1663 = vsel %vm1599, %v1460, 0.0
  %v1664 = vadd.f32 %v1600, %v1601
  %1665 = vadd.xlane.f32.xlu0 %v1664
  %v1666 = vpop.xlane.xlu0 %1665
  %v1667 = vadd.f32 %v1602, %v1603
  %1668 = vadd.xlane.f32.xlu0 %v1667
  %v1669 = vpop.xlane.xlu0 %1668
  %v1670 = vadd.f32 %v1604, %v1605
  %1671 = vadd.xlane.f32.xlu0 %v1670
  %v1672 = vpop.xlane.xlu0 %1671
  %v1673 = vadd.f32 %v1606, %v1607
  %1674 = vadd.xlane.f32.xlu0 %v1673
  %v1675 = vpop.xlane.xlu0 %1674
  %v1676 = vadd.f32 %v1608, %v1609
  %1677 = vadd.xlane.f32.xlu0 %v1676
  %v1678 = vpop.xlane.xlu0 %1677
  %v1679 = vadd.f32 %v1610, %v1611
  %1680 = vadd.xlane.f32.xlu0 %v1679
  %v1681 = vpop.xlane.xlu0 %1680
  %v1682 = vadd.f32 %v1612, %v1613
  %1683 = vadd.xlane.f32.xlu0 %v1682
  %v1684 = vpop.xlane.xlu0 %1683
  %v1685 = vadd.f32 %v1614, %v1615
  %1686 = vadd.xlane.f32.xlu0 %v1685
  %v1687 = vpop.xlane.xlu0 %1686
  %v1688 = vadd.f32 %v1616, %v1617
  %1689 = vadd.xlane.f32.xlu0 %v1688
  %v1690 = vpop.xlane.xlu0 %1689
  %v1691 = vadd.f32 %v1618, %v1619
  %1692 = vadd.xlane.f32.xlu0 %v1691
  %v1693 = vpop.xlane.xlu0 %1692
  %v1694 = vadd.f32 %v1620, %v1621
  %1695 = vadd.xlane.f32.xlu0 %v1694
  %v1696 = vpop.xlane.xlu0 %1695
  %v1697 = vadd.f32 %v1622, %v1623
  %1698 = vadd.xlane.f32.xlu0 %v1697
  %v1699 = vpop.xlane.xlu0 %1698
  %v1700 = vadd.f32 %v1624, %v1625
  %1701 = vadd.xlane.f32.xlu0 %v1700
  %v1702 = vpop.xlane.xlu0 %1701
  %v1703 = vadd.f32 %v1626, %v1627
  %1704 = vadd.xlane.f32.xlu0 %v1703
  %v1705 = vpop.xlane.xlu0 %1704
  %v1706 = vadd.f32 %v1628, %v1629
  %1707 = vadd.xlane.f32.xlu0 %v1706
  %v1708 = vpop.xlane.xlu0 %1707
  %v1709 = vadd.f32 %v1630, %v1631
  %1710 = vadd.xlane.f32.xlu0 %v1709
  %v1711 = vpop.xlane.xlu0 %1710
  %v1712 = vadd.f32 %v1632, %v1633
  %1713 = vadd.xlane.f32.xlu0 %v1712
  %v1714 = vpop.xlane.xlu0 %1713
  %v1715 = vadd.f32 %v1634, %v1635
  %1716 = vadd.xlane.f32.xlu0 %v1715
  %v1717 = vpop.xlane.xlu0 %1716
  %v1718 = vadd.f32 %v1636, %v1637
  %1719 = vadd.xlane.f32.xlu0 %v1718
  %v1720 = vpop.xlane.xlu0 %1719
  %v1721 = vadd.f32 %v1638, %v1639
  %1722 = vadd.xlane.f32.xlu0 %v1721
  %v1723 = vpop.xlane.xlu0 %1722
  %v1724 = vadd.f32 %v1640, %v1641
  %1725 = vadd.xlane.f32.xlu0 %v1724
  %v1726 = vpop.xlane.xlu0 %1725
  %v1727 = vadd.f32 %v1642, %v1643
  %1728 = vadd.xlane.f32.xlu0 %v1727
  %v1729 = vpop.xlane.xlu0 %1728
  %v1730 = vadd.f32 %v1644, %v1645
  %1731 = vadd.xlane.f32.xlu0 %v1730
  %v1732 = vpop.xlane.xlu0 %1731
  %v1733 = vadd.f32 %v1646, %v1647
  %1734 = vadd.xlane.f32.xlu0 %v1733
  %v1735 = vpop.xlane.xlu0 %1734
  %v1736 = vadd.f32 %v1648, %v1649
  %1737 = vadd.xlane.f32.xlu0 %v1736
  %v1738 = vpop.xlane.xlu0 %1737
  %v1739 = vadd.f32 %v1650, %v1651
  %1740 = vadd.xlane.f32.xlu0 %v1739
  %v1741 = vpop.xlane.xlu0 %1740
  %v1742 = vadd.f32 %v1652, %v1653
  %1743 = vadd.xlane.f32.xlu0 %v1742
  %v1744 = vpop.xlane.xlu0 %1743
  %v1745 = vadd.f32 %v1654, %v1655
  %1746 = vadd.xlane.f32.xlu0 %v1745
  %v1747 = vpop.xlane.xlu0 %1746
  %v1748 = vadd.f32 %v1656, %v1657
  %1749 = vadd.xlane.f32.xlu0 %v1748
  %v1750 = vpop.xlane.xlu0 %1749
  %v1751 = vadd.f32 %v1658, %v1659
  %1752 = vadd.xlane.f32.xlu0 %v1751
  %v1753 = vpop.xlane.xlu0 %1752
  %v1754 = vadd.f32 %v1660, %v1661
  %1755 = vadd.xlane.f32.xlu0 %v1754
  %v1756 = vpop.xlane.xlu0 %1755
  %v1757 = vadd.f32 %v1662, %v1663
  %1758 = vadd.xlane.f32.xlu0 %v1757
  %v1759 = vpop.xlane.xlu0 %1758
  %v1760 = vadd.f32 %v1334, %v1666
  %v1761 = vadd.f32 %v1336, %v1666
  %v1762 = vadd.f32 %v1338, %v1669
  %v1763 = vadd.f32 %v1340, %v1669
  %v1764 = vadd.f32 %v1342, %v1672
  %v1765 = vadd.f32 %v1344, %v1672
  %v1766 = vadd.f32 %v1346, %v1675
  %v1767 = vadd.f32 %v1348, %v1675
  %v1768 = vadd.f32 %v1350, %v1678
  %v1769 = vadd.f32 %v1352, %v1678
  %v1770 = vadd.f32 %v1354, %v1681
  %v1771 = vadd.f32 %v1356, %v1681
  %v1772 = vadd.f32 %v1358, %v1684
  %v1773 = vadd.f32 %v1360, %v1684
  %v1774 = vadd.f32 %v1362, %v1687
  %v1775 = vadd.f32 %v1364, %v1687
  %v1776 = vadd.f32 %v1366, %v1690
  %v1777 = vadd.f32 %v1368, %v1690
  %v1778 = vadd.f32 %v1370, %v1693
  %v1779 = vadd.f32 %v1372, %v1693
  %v1780 = vadd.f32 %v1374, %v1696
  %v1781 = vadd.f32 %v1376, %v1696
  %v1782 = vadd.f32 %v1378, %v1699
  %v1783 = vadd.f32 %v1380, %v1699
  %v1784 = vadd.f32 %v1382, %v1702
  %v1785 = vadd.f32 %v1384, %v1702
  %v1786 = vadd.f32 %v1386, %v1705
  %v1787 = vadd.f32 %v1388, %v1705
  %v1788 = vadd.f32 %v1390, %v1708
  %v1789 = vadd.f32 %v1392, %v1708
  %v1790 = vadd.f32 %v1394, %v1711
  %v1791 = vadd.f32 %v1396, %v1711
  %v1792 = vadd.f32 %v1398, %v1714
  %v1793 = vadd.f32 %v1400, %v1714
  %v1794 = vadd.f32 %v1402, %v1717
  %v1795 = vadd.f32 %v1404, %v1717
  %v1796 = vadd.f32 %v1406, %v1720
  %v1797 = vadd.f32 %v1408, %v1720
  %v1798 = vadd.f32 %v1410, %v1723
  %v1799 = vadd.f32 %v1412, %v1723
  %v1800 = vadd.f32 %v1414, %v1726
  %v1801 = vadd.f32 %v1416, %v1726
  %v1802 = vadd.f32 %v1418, %v1729
  %v1803 = vadd.f32 %v1420, %v1729
  %v1804 = vadd.f32 %v1422, %v1732
  %v1805 = vadd.f32 %v1424, %v1732
  %v1806 = vadd.f32 %v1426, %v1735
  %v1807 = vadd.f32 %v1428, %v1735
  %v1808 = vadd.f32 %v1430, %v1738
  %v1809 = vadd.f32 %v1432, %v1738
  %v1810 = vadd.f32 %v1434, %v1741
  %v1811 = vadd.f32 %v1436, %v1741
  %v1812 = vadd.f32 %v1438, %v1744
  %v1813 = vadd.f32 %v1440, %v1744
  %v1814 = vadd.f32 %v1442, %v1747
  %v1815 = vadd.f32 %v1444, %v1747
  %v1816 = vadd.f32 %v1446, %v1750
  %v1817 = vadd.f32 %v1448, %v1750
  %v1818 = vadd.f32 %v1450, %v1753
  %v1819 = vadd.f32 %v1452, %v1753
  %v1820 = vadd.f32 %v1454, %v1756
  %v1821 = vadd.f32 %v1456, %v1756
  %v1822 = vadd.f32 %v1458, %v1759
  %v1823 = vadd.f32 %v1460, %v1759
  %v1824 = vlog2.pop %v1760
  %v1825 = vmul.f32 %v1824, 0.6931472
  %v1826 = vlog2.pop %v1761
  %v1827 = vmul.f32 %v1826, 0.6931472
  %v1828 = vlog2.pop %v1762
  %v1829 = vmul.f32 %v1828, 0.6931472
  %v1830 = vlog2.pop %v1763
  %v1831 = vmul.f32 %v1830, 0.6931472
  %v1832 = vlog2.pop %v1764
  %v1833 = vmul.f32 %v1832, 0.6931472
  %v1834 = vlog2.pop %v1765
  %v1835 = vmul.f32 %v1834, 0.6931472
  %v1836 = vlog2.pop %v1766
  %v1837 = vmul.f32 %v1836, 0.6931472
  %v1838 = vlog2.pop %v1767
  %v1839 = vmul.f32 %v1838, 0.6931472
  %v1840 = vlog2.pop %v1768
  %v1841 = vmul.f32 %v1840, 0.6931472
  %v1842 = vlog2.pop %v1769
  %v1843 = vmul.f32 %v1842, 0.6931472
  %v1844 = vlog2.pop %v1770
  %v1845 = vmul.f32 %v1844, 0.6931472
  %v1846 = vlog2.pop %v1771
  %v1847 = vmul.f32 %v1846, 0.6931472
  %v1848 = vlog2.pop %v1772
  %v1849 = vmul.f32 %v1848, 0.6931472
  %v1850 = vlog2.pop %v1773
  %v1851 = vmul.f32 %v1850, 0.6931472
  %v1852 = vlog2.pop %v1774
  %v1853 = vmul.f32 %v1852, 0.6931472
  %v1854 = vlog2.pop %v1775
  %v1855 = vmul.f32 %v1854, 0.6931472
  %v1856 = vlog2.pop %v1776
  %v1857 = vmul.f32 %v1856, 0.6931472
  %v1858 = vlog2.pop %v1777
  %v1859 = vmul.f32 %v1858, 0.6931472
  %v1860 = vlog2.pop %v1778
  %v1861 = vmul.f32 %v1860, 0.6931472
  %v1862 = vlog2.pop %v1779
  %v1863 = vmul.f32 %v1862, 0.6931472
  %v1864 = vlog2.pop %v1780
  %v1865 = vmul.f32 %v1864, 0.6931472
  %v1866 = vlog2.pop %v1781
  %v1867 = vmul.f32 %v1866, 0.6931472
  %v1868 = vlog2.pop %v1782
  %v1869 = vmul.f32 %v1868, 0.6931472
  %v1870 = vlog2.pop %v1783
  %v1871 = vmul.f32 %v1870, 0.6931472
  %v1872 = vlog2.pop %v1784
  %v1873 = vmul.f32 %v1872, 0.6931472
  %v1874 = vlog2.pop %v1785
  %v1875 = vmul.f32 %v1874, 0.6931472
  %v1876 = vlog2.pop %v1786
  %v1877 = vmul.f32 %v1876, 0.6931472
  %v1878 = vlog2.pop %v1787
  %v1879 = vmul.f32 %v1878, 0.6931472
  %v1880 = vlog2.pop %v1788
  %v1881 = vmul.f32 %v1880, 0.6931472
  %v1882 = vlog2.pop %v1789
  %v1883 = vmul.f32 %v1882, 0.6931472
  %v1884 = vlog2.pop %v1790
  %v1885 = vmul.f32 %v1884, 0.6931472
  %v1886 = vlog2.pop %v1791
  %v1887 = vmul.f32 %v1886, 0.6931472
  %v1888 = vlog2.pop %v1792
  %v1889 = vmul.f32 %v1888, 0.6931472
  %v1890 = vlog2.pop %v1793
  %v1891 = vmul.f32 %v1890, 0.6931472
  %v1892 = vlog2.pop %v1794
  %v1893 = vmul.f32 %v1892, 0.6931472
  %v1894 = vlog2.pop %v1795
  %v1895 = vmul.f32 %v1894, 0.6931472
  %v1896 = vlog2.pop %v1796
  %v1897 = vmul.f32 %v1896, 0.6931472
  %v1898 = vlog2.pop %v1797
  %v1899 = vmul.f32 %v1898, 0.6931472
  %v1900 = vlog2.pop %v1798
  %v1901 = vmul.f32 %v1900, 0.6931472
  %v1902 = vlog2.pop %v1799
  %v1903 = vmul.f32 %v1902, 0.6931472
  %v1904 = vlog2.pop %v1800
  %v1905 = vmul.f32 %v1904, 0.6931472
  %v1906 = vlog2.pop %v1801
  %v1907 = vmul.f32 %v1906, 0.6931472
  %v1908 = vlog2.pop %v1802
  %v1909 = vmul.f32 %v1908, 0.6931472
  %v1910 = vlog2.pop %v1803
  %v1911 = vmul.f32 %v1910, 0.6931472
  %v1912 = vlog2.pop %v1804
  %v1913 = vmul.f32 %v1912, 0.6931472
  %v1914 = vlog2.pop %v1805
  %v1915 = vmul.f32 %v1914, 0.6931472
  %v1916 = vlog2.pop %v1806
  %v1917 = vmul.f32 %v1916, 0.6931472
  %v1918 = vlog2.pop %v1807
  %v1919 = vmul.f32 %v1918, 0.6931472
  %v1920 = vlog2.pop %v1808
  %v1921 = vmul.f32 %v1920, 0.6931472
  %v1922 = vlog2.pop %v1809
  %v1923 = vmul.f32 %v1922, 0.6931472
  %v1924 = vlog2.pop %v1810
  %v1925 = vmul.f32 %v1924, 0.6931472
  %v1926 = vlog2.pop %v1811
  %v1927 = vmul.f32 %v1926, 0.6931472
  %v1928 = vlog2.pop %v1812
  %v1929 = vmul.f32 %v1928, 0.6931472
  %v1930 = vlog2.pop %v1813
  %v1931 = vmul.f32 %v1930, 0.6931472
  %v1932 = vlog2.pop %v1814
  %v1933 = vmul.f32 %v1932, 0.6931472
  %v1934 = vlog2.pop %v1815
  %v1935 = vmul.f32 %v1934, 0.6931472
  %v1936 = vlog2.pop %v1816
  %v1937 = vmul.f32 %v1936, 0.6931472
  %v1938 = vlog2.pop %v1817
  %v1939 = vmul.f32 %v1938, 0.6931472
  %v1940 = vlog2.pop %v1818
  %v1941 = vmul.f32 %v1940, 0.6931472
  %v1942 = vlog2.pop %v1819
  %v1943 = vmul.f32 %v1942, 0.6931472
  %v1944 = vlog2.pop %v1820
  %v1945 = vmul.f32 %v1944, 0.6931472
  %v1946 = vlog2.pop %v1821
  %v1947 = vmul.f32 %v1946, 0.6931472
  %v1948 = vlog2.pop %v1822
  %v1949 = vmul.f32 %v1948, 0.6931472
  %v1950 = vlog2.pop %v1823
  %v1951 = vmul.f32 %v1950, 0.6931472
  %v1952 = vsub.f32 %v1269, %v1825
  %v1953 = vsub.f32 %v1270, %v1827
  %v1954 = vsub.f32 %v1271, %v1829
  %v1955 = vsub.f32 %v1272, %v1831
  %v1956 = vsub.f32 %v1273, %v1833
  %v1957 = vsub.f32 %v1274, %v1835
  %v1958 = vsub.f32 %v1275, %v1837
  %v1959 = vsub.f32 %v1276, %v1839
  %v1960 = vsub.f32 %v1277, %v1841
  %v1961 = vsub.f32 %v1278, %v1843
  %v1962 = vsub.f32 %v1279, %v1845
  %v1963 = vsub.f32 %v1280, %v1847
  %v1964 = vsub.f32 %v1281, %v1849
  %v1965 = vsub.f32 %v1282, %v1851
  %v1966 = vsub.f32 %v1283, %v1853
  %v1967 = vsub.f32 %v1284, %v1855
  %v1968 = vsub.f32 %v1285, %v1857
  %v1969 = vsub.f32 %v1286, %v1859
  %v1970 = vsub.f32 %v1287, %v1861
  %v1971 = vsub.f32 %v1288, %v1863
  %v1972 = vsub.f32 %v1289, %v1865
  %v1973 = vsub.f32 %v1290, %v1867
  %v1974 = vsub.f32 %v1291, %v1869
  %v1975 = vsub.f32 %v1292, %v1871
  %v1976 = vsub.f32 %v1293, %v1873
  %v1977 = vsub.f32 %v1294, %v1875
  %v1978 = vsub.f32 %v1295, %v1877
  %v1979 = vsub.f32 %v1296, %v1879
  %v1980 = vsub.f32 %v1297, %v1881
  %v1981 = vsub.f32 %v1298, %v1883
  %v1982 = vsub.f32 %v1299, %v1885
  %v1983 = vsub.f32 %v1300, %v1887
  %v1984 = vsub.f32 %v1301, %v1889
  %v1985 = vsub.f32 %v1302, %v1891
  %v1986 = vsub.f32 %v1303, %v1893
  %v1987 = vsub.f32 %v1304, %v1895
  %v1988 = vsub.f32 %v1305, %v1897
  %v1989 = vsub.f32 %v1306, %v1899
  %v1990 = vsub.f32 %v1307, %v1901
  %v1991 = vsub.f32 %v1308, %v1903
  %v1992 = vsub.f32 %v1309, %v1905
  %v1993 = vsub.f32 %v1310, %v1907
  %v1994 = vsub.f32 %v1311, %v1909
  %v1995 = vsub.f32 %v1312, %v1911
  %v1996 = vsub.f32 %v1313, %v1913
  %v1997 = vsub.f32 %v1314, %v1915
  %v1998 = vsub.f32 %v1315, %v1917
  %v1999 = vsub.f32 %v1316, %v1919
  %v2000 = vsub.f32 %v1317, %v1921
  %v2001 = vsub.f32 %v1318, %v1923
  %v2002 = vsub.f32 %v1319, %v1925
  %v2003 = vsub.f32 %v1320, %v1927
  %v2004 = vsub.f32 %v1321, %v1929
  %v2005 = vsub.f32 %v1322, %v1931
  %v2006 = vsub.f32 %v1323, %v1933
  %v2007 = vsub.f32 %v1324, %v1935
  %v2008 = vsub.f32 %v1325, %v1937
  %v2009 = vsub.f32 %v1326, %v1939
  %v2010 = vsub.f32 %v1327, %v1941
  %v2011 = vsub.f32 %v1328, %v1943
  %v2012 = vsub.f32 %v1329, %v1945
  %v2013 = vsub.f32 %v1330, %v1947
  %v2014 = vsub.f32 %v1331, %v1949
  %v2015 = vsub.f32 %v1332, %v1951
  %vm2016 = vmand %vm943, %vm1109
  %vm2017 = vmand %vm944, %vm1110
  %vm2018 = vmand %vm945, %vm1111
  %vm2019 = vmand %vm946, %vm1112
  %vm2020 = vmand %vm947, %vm1113
  %vm2021 = vmand %vm948, %vm1114
  %vm2022 = vmand %vm949, %vm1115
  %vm2023 = vmand %vm950, %vm1116
  %vm2024 = vmand %vm951, %vm1117
  %vm2025 = vmand %vm952, %vm1118
  %vm2026 = vmand %vm953, %vm1119
  %vm2027 = vmand %vm954, %vm1120
  %vm2028 = vmand %vm955, %vm1121
  %vm2029 = vmand %vm956, %vm1122
  %vm2030 = vmand %vm957, %vm1123
  %vm2031 = vmand %vm958, %vm1124
  %vm2032 = vmand %vm959, %vm1125
  %vm2033 = vmand %vm960, %vm1126
  %vm2034 = vmand %vm961, %vm1127
  %vm2035 = vmand %vm962, %vm1128
  %vm2036 = vmand %vm963, %vm1129
  %vm2037 = vmand %vm964, %vm1130
  %vm2038 = vmand %vm965, %vm1131
  %vm2039 = vmand %vm966, %vm1132
  %vm2040 = vmand %vm967, %vm1133
  %vm2041 = vmand %vm968, %vm1134
  %vm2042 = vmand %vm969, %vm1135
  %vm2043 = vmand %vm970, %vm1136
  %vm2044 = vmand %vm971, %vm1137
  %vm2045 = vmand %vm972, %vm1138
  %vm2046 = vmand %vm973, %vm1139
  %vm2047 = vmand %vm974, %vm1140
  %vm2048 = vmand %vm975, %vm1141
  %vm2049 = vmand %vm976, %vm1142
  %vm2050 = vmand %vm977, %vm1143
  %vm2051 = vmand %vm978, %vm1144
  %vm2052 = vmand %vm979, %vm1145
  %vm2053 = vmand %vm980, %vm1146
  %vm2054 = vmand %vm981, %vm1147
  %vm2055 = vmand %vm982, %vm1148
  %vm2056 = vmand %vm983, %vm1149
  %vm2057 = vmand %vm984, %vm1150
  %vm2058 = vmand %vm985, %vm1151
  %vm2059 = vmand %vm986, %vm1152
  %vm2060 = vmand %vm987, %vm1153
  %vm2061 = vmand %vm988, %vm1154
  %vm2062 = vmand %vm989, %vm1155
  %vm2063 = vmand %vm990, %vm1156
  %vm2064 = vmand %vm991, %vm1157
  %vm2065 = vmand %vm992, %vm1158
  %vm2066 = vmand %vm993, %vm1159
  %vm2067 = vmand %vm994, %vm1160
  %vm2068 = vmand %vm995, %vm1161
  %vm2069 = vmand %vm996, %vm1162
  %vm2070 = vmand %vm997, %vm1163
  %vm2071 = vmand %vm998, %vm1164
  %vm2072 = vmand %vm999, %vm1165
  %vm2073 = vmand %vm1000, %vm1166
  %vm2074 = vmand %vm1001, %vm1167
  %vm2075 = vmand %vm1002, %vm1168
  %vm2076 = vmand %vm1003, %vm1169
  %vm2077 = vmand %vm1004, %vm1170
  %vm2078 = vmand %vm1005, %vm1171
  %vm2079 = vmand %vm1006, %vm1172
  %vm2080 = vmand %vm2016, %vm1534
  %vm2081 = vmand %vm2017, %vm1535
  %vm2082 = vmand %vm2018, %vm1534
  %vm2083 = vmand %vm2019, %vm1535
  %vm2084 = vmand %vm2020, %vm1534
  %vm2085 = vmand %vm2021, %vm1535
  %vm2086 = vmand %vm2022, %vm1534
  %vm2087 = vmand %vm2023, %vm1535
  %vm2088 = vmand %vm2024, %vm1534
  %vm2089 = vmand %vm2025, %vm1535
  %vm2090 = vmand %vm2026, %vm1534
  %vm2091 = vmand %vm2027, %vm1535
  %vm2092 = vmand %vm2028, %vm1534
  %vm2093 = vmand %vm2029, %vm1535
  %vm2094 = vmand %vm2030, %vm1534
  %vm2095 = vmand %vm2031, %vm1535
  %vm2096 = vmand %vm2032, %vm1534
  %vm2097 = vmand %vm2033, %vm1535
  %vm2098 = vmand %vm2034, %vm1534
  %vm2099 = vmand %vm2035, %vm1535
  %vm2100 = vmand %vm2036, %vm1534
  %vm2101 = vmand %vm2037, %vm1535
  %vm2102 = vmand %vm2038, %vm1534
  %vm2103 = vmand %vm2039, %vm1535
  %vm2104 = vmand %vm2040, %vm1534
  %vm2105 = vmand %vm2041, %vm1535
  %vm2106 = vmand %vm2042, %vm1534
  %vm2107 = vmand %vm2043, %vm1535
  %vm2108 = vmand %vm2044, %vm1534
  %vm2109 = vmand %vm2045, %vm1535
  %vm2110 = vmand %vm2046, %vm1534
  %vm2111 = vmand %vm2047, %vm1535
  %vm2112 = vmand %vm2048, %vm1534
  %vm2113 = vmand %vm2049, %vm1535
  %vm2114 = vmand %vm2050, %vm1534
  %vm2115 = vmand %vm2051, %vm1535
  %vm2116 = vmand %vm2052, %vm1534
  %vm2117 = vmand %vm2053, %vm1535
  %vm2118 = vmand %vm2054, %vm1534
  %vm2119 = vmand %vm2055, %vm1535
  %vm2120 = vmand %vm2056, %vm1534
  %vm2121 = vmand %vm2057, %vm1535
  %vm2122 = vmand %vm2058, %vm1534
  %vm2123 = vmand %vm2059, %vm1535
  %vm2124 = vmand %vm2060, %vm1534
  %vm2125 = vmand %vm2061, %vm1535
  %vm2126 = vmand %vm2062, %vm1534
  %vm2127 = vmand %vm2063, %vm1535
  %vm2128 = vmand %vm2064, %vm1534
  %vm2129 = vmand %vm2065, %vm1535
  %vm2130 = vmand %vm2066, %vm1534
  %vm2131 = vmand %vm2067, %vm1535
  %vm2132 = vmand %vm2068, %vm1534
  %vm2133 = vmand %vm2069, %vm1535
  %vm2134 = vmand %vm2070, %vm1534
  %vm2135 = vmand %vm2071, %vm1535
  %vm2136 = vmand %vm2072, %vm1534
  %vm2137 = vmand %vm2073, %vm1535
  %vm2138 = vmand %vm2074, %vm1534
  %vm2139 = vmand %vm2075, %vm1535
  %vm2140 = vmand %vm2076, %vm1534
  %vm2141 = vmand %vm2077, %vm1535
  %vm2142 = vmand %vm2078, %vm1534
  %vm2143 = vmand %vm2079, %vm1535
  %v2144 = vsel %vm2080, %v1952, 0.0
  %v2145 = vsel %vm2081, %v1953, 0.0
  %v2146 = vsel %vm2082, %v1954, 0.0
  %v2147 = vsel %vm2083, %v1955, 0.0
  %v2148 = vsel %vm2084, %v1956, 0.0
  %v2149 = vsel %vm2085, %v1957, 0.0
  %v2150 = vsel %vm2086, %v1958, 0.0
  %v2151 = vsel %vm2087, %v1959, 0.0
  %v2152 = vsel %vm2088, %v1960, 0.0
  %v2153 = vsel %vm2089, %v1961, 0.0
  %v2154 = vsel %vm2090, %v1962, 0.0
  %v2155 = vsel %vm2091, %v1963, 0.0
  %v2156 = vsel %vm2092, %v1964, 0.0
  %v2157 = vsel %vm2093, %v1965, 0.0
  %v2158 = vsel %vm2094, %v1966, 0.0
  %v2159 = vsel %vm2095, %v1967, 0.0
  %v2160 = vsel %vm2096, %v1968, 0.0
  %v2161 = vsel %vm2097, %v1969, 0.0
  %v2162 = vsel %vm2098, %v1970, 0.0
  %v2163 = vsel %vm2099, %v1971, 0.0
  %v2164 = vsel %vm2100, %v1972, 0.0
  %v2165 = vsel %vm2101, %v1973, 0.0
  %v2166 = vsel %vm2102, %v1974, 0.0
  %v2167 = vsel %vm2103, %v1975, 0.0
  %v2168 = vsel %vm2104, %v1976, 0.0
  %v2169 = vsel %vm2105, %v1977, 0.0
  %v2170 = vsel %vm2106, %v1978, 0.0
  %v2171 = vsel %vm2107, %v1979, 0.0
  %v2172 = vsel %vm2108, %v1980, 0.0
  %v2173 = vsel %vm2109, %v1981, 0.0
  %v2174 = vsel %vm2110, %v1982, 0.0
  %v2175 = vsel %vm2111, %v1983, 0.0
  %v2176 = vsel %vm2112, %v1984, 0.0
  %v2177 = vsel %vm2113, %v1985, 0.0
  %v2178 = vsel %vm2114, %v1986, 0.0
  %v2179 = vsel %vm2115, %v1987, 0.0
  %v2180 = vsel %vm2116, %v1988, 0.0
  %v2181 = vsel %vm2117, %v1989, 0.0
  %v2182 = vsel %vm2118, %v1990, 0.0
  %v2183 = vsel %vm2119, %v1991, 0.0
  %v2184 = vsel %vm2120, %v1992, 0.0
  %v2185 = vsel %vm2121, %v1993, 0.0
  %v2186 = vsel %vm2122, %v1994, 0.0
  %v2187 = vsel %vm2123, %v1995, 0.0
  %v2188 = vsel %vm2124, %v1996, 0.0
  %v2189 = vsel %vm2125, %v1997, 0.0
  %v2190 = vsel %vm2126, %v1998, 0.0
  %v2191 = vsel %vm2127, %v1999, 0.0
  %v2192 = vsel %vm2128, %v2000, 0.0
  %v2193 = vsel %vm2129, %v2001, 0.0
  %v2194 = vsel %vm2130, %v2002, 0.0
  %v2195 = vsel %vm2131, %v2003, 0.0
  %v2196 = vsel %vm2132, %v2004, 0.0
  %v2197 = vsel %vm2133, %v2005, 0.0
  %v2198 = vsel %vm2134, %v2006, 0.0
  %v2199 = vsel %vm2135, %v2007, 0.0
  %v2200 = vsel %vm2136, %v2008, 0.0
  %v2201 = vsel %vm2137, %v2009, 0.0
  %v2202 = vsel %vm2138, %v2010, 0.0
  %v2203 = vsel %vm2139, %v2011, 0.0
  %v2204 = vsel %vm2140, %v2012, 0.0
  %v2205 = vsel %vm2141, %v2013, 0.0
  %v2206 = vsel %vm2142, %v2014, 0.0
  %v2207 = vsel %vm2143, %v2015, 0.0
  %v2208 = vadd.f32 %v2144, %v2145
  %2209 = vadd.xlane.f32.xlu0 %v2208
  %v2210 = vpop.xlane.xlu0 %2209
  %v2211 = vadd.f32 %v2146, %v2147
  %2212 = vadd.xlane.f32.xlu0 %v2211
  %v2213 = vpop.xlane.xlu0 %2212
  %v2214 = vadd.f32 %v2148, %v2149
  %2215 = vadd.xlane.f32.xlu0 %v2214
  %v2216 = vpop.xlane.xlu0 %2215
  %v2217 = vadd.f32 %v2150, %v2151
  %2218 = vadd.xlane.f32.xlu0 %v2217
  %v2219 = vpop.xlane.xlu0 %2218
  %v2220 = vadd.f32 %v2152, %v2153
  %2221 = vadd.xlane.f32.xlu0 %v2220
  %v2222 = vpop.xlane.xlu0 %2221
  %v2223 = vadd.f32 %v2154, %v2155
  %2224 = vadd.xlane.f32.xlu0 %v2223
  %v2225 = vpop.xlane.xlu0 %2224
  %v2226 = vadd.f32 %v2156, %v2157
  %2227 = vadd.xlane.f32.xlu0 %v2226
  %v2228 = vpop.xlane.xlu0 %2227
  %v2229 = vadd.f32 %v2158, %v2159
  %2230 = vadd.xlane.f32.xlu0 %v2229
  %v2231 = vpop.xlane.xlu0 %2230
  %v2232 = vadd.f32 %v2160, %v2161
  %2233 = vadd.xlane.f32.xlu0 %v2232
  %v2234 = vpop.xlane.xlu0 %2233
  %v2235 = vadd.f32 %v2162, %v2163
  %2236 = vadd.xlane.f32.xlu0 %v2235
  %v2237 = vpop.xlane.xlu0 %2236
  %v2238 = vadd.f32 %v2164, %v2165
  %2239 = vadd.xlane.f32.xlu0 %v2238
  %v2240 = vpop.xlane.xlu0 %2239
  %v2241 = vadd.f32 %v2166, %v2167
  %2242 = vadd.xlane.f32.xlu0 %v2241
  %v2243 = vpop.xlane.xlu0 %2242
  %v2244 = vadd.f32 %v2168, %v2169
  %2245 = vadd.xlane.f32.xlu0 %v2244
  %v2246 = vpop.xlane.xlu0 %2245
  %v2247 = vadd.f32 %v2170, %v2171
  %2248 = vadd.xlane.f32.xlu0 %v2247
  %v2249 = vpop.xlane.xlu0 %2248
  %v2250 = vadd.f32 %v2172, %v2173
  %2251 = vadd.xlane.f32.xlu0 %v2250
  %v2252 = vpop.xlane.xlu0 %2251
  %v2253 = vadd.f32 %v2174, %v2175
  %2254 = vadd.xlane.f32.xlu0 %v2253
  %v2255 = vpop.xlane.xlu0 %2254
  %v2256 = vadd.f32 %v2176, %v2177
  %2257 = vadd.xlane.f32.xlu0 %v2256
  %v2258 = vpop.xlane.xlu0 %2257
  %v2259 = vadd.f32 %v2178, %v2179
  %2260 = vadd.xlane.f32.xlu0 %v2259
  %v2261 = vpop.xlane.xlu0 %2260
  %v2262 = vadd.f32 %v2180, %v2181
  %2263 = vadd.xlane.f32.xlu0 %v2262
  %v2264 = vpop.xlane.xlu0 %2263
  %v2265 = vadd.f32 %v2182, %v2183
  %2266 = vadd.xlane.f32.xlu0 %v2265
  %v2267 = vpop.xlane.xlu0 %2266
  %v2268 = vadd.f32 %v2184, %v2185
  %2269 = vadd.xlane.f32.xlu0 %v2268
  %v2270 = vpop.xlane.xlu0 %2269
  %v2271 = vadd.f32 %v2186, %v2187
  %2272 = vadd.xlane.f32.xlu0 %v2271
  %v2273 = vpop.xlane.xlu0 %2272
  %v2274 = vadd.f32 %v2188, %v2189
  %2275 = vadd.xlane.f32.xlu0 %v2274
  %v2276 = vpop.xlane.xlu0 %2275
  %v2277 = vadd.f32 %v2190, %v2191
  %2278 = vadd.xlane.f32.xlu0 %v2277
  %v2279 = vpop.xlane.xlu0 %2278
  %v2280 = vadd.f32 %v2192, %v2193
  %2281 = vadd.xlane.f32.xlu0 %v2280
  %v2282 = vpop.xlane.xlu0 %2281
  %v2283 = vadd.f32 %v2194, %v2195
  %2284 = vadd.xlane.f32.xlu0 %v2283
  %v2285 = vpop.xlane.xlu0 %2284
  %v2286 = vadd.f32 %v2196, %v2197
  %2287 = vadd.xlane.f32.xlu0 %v2286
  %v2288 = vpop.xlane.xlu0 %2287
  %v2289 = vadd.f32 %v2198, %v2199
  %2290 = vadd.xlane.f32.xlu0 %v2289
  %v2291 = vpop.xlane.xlu0 %2290
  %v2292 = vadd.f32 %v2200, %v2201
  %2293 = vadd.xlane.f32.xlu0 %v2292
  %v2294 = vpop.xlane.xlu0 %2293
  %v2295 = vadd.f32 %v2202, %v2203
  %2296 = vadd.xlane.f32.xlu0 %v2295
  %v2297 = vpop.xlane.xlu0 %2296
  %v2298 = vadd.f32 %v2204, %v2205
  %2299 = vadd.xlane.f32.xlu0 %v2298
  %v2300 = vpop.xlane.xlu0 %2299
  %v2301 = vadd.f32 %v2206, %v2207
  %2302 = vadd.xlane.f32.xlu0 %v2301
  %v2303 = vpop.xlane.xlu0 %2302
  %v2304 = vsel %vm2080, 1.0, 0.0
  %v2305 = vsel %vm2081, 1.0, 0.0
  %v2306 = vsel %vm2082, 1.0, 0.0
  %v2307 = vsel %vm2083, 1.0, 0.0
  %v2308 = vsel %vm2084, 1.0, 0.0
  %v2309 = vsel %vm2085, 1.0, 0.0
  %v2310 = vsel %vm2086, 1.0, 0.0
  %v2311 = vsel %vm2087, 1.0, 0.0
  %v2312 = vsel %vm2088, 1.0, 0.0
  %v2313 = vsel %vm2089, 1.0, 0.0
  %v2314 = vsel %vm2090, 1.0, 0.0
  %v2315 = vsel %vm2091, 1.0, 0.0
  %v2316 = vsel %vm2092, 1.0, 0.0
  %v2317 = vsel %vm2093, 1.0, 0.0
  %v2318 = vsel %vm2094, 1.0, 0.0
  %v2319 = vsel %vm2095, 1.0, 0.0
  %v2320 = vsel %vm2096, 1.0, 0.0
  %v2321 = vsel %vm2097, 1.0, 0.0
  %v2322 = vsel %vm2098, 1.0, 0.0
  %v2323 = vsel %vm2099, 1.0, 0.0
  %v2324 = vsel %vm2100, 1.0, 0.0
  %v2325 = vsel %vm2101, 1.0, 0.0
  %v2326 = vsel %vm2102, 1.0, 0.0
  %v2327 = vsel %vm2103, 1.0, 0.0
  %v2328 = vsel %vm2104, 1.0, 0.0
  %v2329 = vsel %vm2105, 1.0, 0.0
  %v2330 = vsel %vm2106, 1.0, 0.0
  %v2331 = vsel %vm2107, 1.0, 0.0
  %v2332 = vsel %vm2108, 1.0, 0.0
  %v2333 = vsel %vm2109, 1.0, 0.0
  %v2334 = vsel %vm2110, 1.0, 0.0
  %v2335 = vsel %vm2111, 1.0, 0.0
  %v2336 = vsel %vm2112, 1.0, 0.0
  %v2337 = vsel %vm2113, 1.0, 0.0
  %v2338 = vsel %vm2114, 1.0, 0.0
  %v2339 = vsel %vm2115, 1.0, 0.0
  %v2340 = vsel %vm2116, 1.0, 0.0
  %v2341 = vsel %vm2117, 1.0, 0.0
  %v2342 = vsel %vm2118, 1.0, 0.0
  %v2343 = vsel %vm2119, 1.0, 0.0
  %v2344 = vsel %vm2120, 1.0, 0.0
  %v2345 = vsel %vm2121, 1.0, 0.0
  %v2346 = vsel %vm2122, 1.0, 0.0
  %v2347 = vsel %vm2123, 1.0, 0.0
  %v2348 = vsel %vm2124, 1.0, 0.0
  %v2349 = vsel %vm2125, 1.0, 0.0
  %v2350 = vsel %vm2126, 1.0, 0.0
  %v2351 = vsel %vm2127, 1.0, 0.0
  %v2352 = vsel %vm2128, 1.0, 0.0
  %v2353 = vsel %vm2129, 1.0, 0.0
  %v2354 = vsel %vm2130, 1.0, 0.0
  %v2355 = vsel %vm2131, 1.0, 0.0
  %v2356 = vsel %vm2132, 1.0, 0.0
  %v2357 = vsel %vm2133, 1.0, 0.0
  %v2358 = vsel %vm2134, 1.0, 0.0
  %v2359 = vsel %vm2135, 1.0, 0.0
  %v2360 = vsel %vm2136, 1.0, 0.0
  %v2361 = vsel %vm2137, 1.0, 0.0
  %v2362 = vsel %vm2138, 1.0, 0.0
  %v2363 = vsel %vm2139, 1.0, 0.0
  %v2364 = vsel %vm2140, 1.0, 0.0
  %v2365 = vsel %vm2141, 1.0, 0.0
  %v2366 = vsel %vm2142, 1.0, 0.0
  %v2367 = vsel %vm2143, 1.0, 0.0
  %v2368 = vadd.f32 %v2304, %v2305
  %2369 = vadd.xlane.f32.xlu0 %v2368
  %v2370 = vpop.xlane.xlu0 %2369
  %v2371 = vadd.f32 %v2306, %v2307
  %2372 = vadd.xlane.f32.xlu0 %v2371
  %v2373 = vpop.xlane.xlu0 %2372
  %v2374 = vadd.f32 %v2308, %v2309
  %2375 = vadd.xlane.f32.xlu0 %v2374
  %v2376 = vpop.xlane.xlu0 %2375
  %v2377 = vadd.f32 %v2310, %v2311
  %2378 = vadd.xlane.f32.xlu0 %v2377
  %v2379 = vpop.xlane.xlu0 %2378
  %v2380 = vadd.f32 %v2312, %v2313
  %2381 = vadd.xlane.f32.xlu0 %v2380
  %v2382 = vpop.xlane.xlu0 %2381
  %v2383 = vadd.f32 %v2314, %v2315
  %2384 = vadd.xlane.f32.xlu0 %v2383
  %v2385 = vpop.xlane.xlu0 %2384
  %v2386 = vadd.f32 %v2316, %v2317
  %2387 = vadd.xlane.f32.xlu0 %v2386
  %v2388 = vpop.xlane.xlu0 %2387
  %v2389 = vadd.f32 %v2318, %v2319
  %2390 = vadd.xlane.f32.xlu0 %v2389
  %v2391 = vpop.xlane.xlu0 %2390
  %v2392 = vadd.f32 %v2320, %v2321
  %2393 = vadd.xlane.f32.xlu0 %v2392
  %v2394 = vpop.xlane.xlu0 %2393
  %v2395 = vadd.f32 %v2322, %v2323
  %2396 = vadd.xlane.f32.xlu0 %v2395
  %v2397 = vpop.xlane.xlu0 %2396
  %v2398 = vadd.f32 %v2324, %v2325
  %2399 = vadd.xlane.f32.xlu0 %v2398
  %v2400 = vpop.xlane.xlu0 %2399
  %v2401 = vadd.f32 %v2326, %v2327
  %2402 = vadd.xlane.f32.xlu0 %v2401
  %v2403 = vpop.xlane.xlu0 %2402
  %v2404 = vadd.f32 %v2328, %v2329
  %2405 = vadd.xlane.f32.xlu0 %v2404
  %v2406 = vpop.xlane.xlu0 %2405
  %v2407 = vadd.f32 %v2330, %v2331
  %2408 = vadd.xlane.f32.xlu0 %v2407
  %v2409 = vpop.xlane.xlu0 %2408
  %v2410 = vadd.f32 %v2332, %v2333
  %2411 = vadd.xlane.f32.xlu0 %v2410
  %v2412 = vpop.xlane.xlu0 %2411
  %v2413 = vadd.f32 %v2334, %v2335
  %2414 = vadd.xlane.f32.xlu0 %v2413
  %v2415 = vpop.xlane.xlu0 %2414
  %v2416 = vadd.f32 %v2336, %v2337
  %2417 = vadd.xlane.f32.xlu0 %v2416
  %v2418 = vpop.xlane.xlu0 %2417
  %v2419 = vadd.f32 %v2338, %v2339
  %2420 = vadd.xlane.f32.xlu0 %v2419
  %v2421 = vpop.xlane.xlu0 %2420
  %v2422 = vadd.f32 %v2340, %v2341
  %2423 = vadd.xlane.f32.xlu0 %v2422
  %v2424 = vpop.xlane.xlu0 %2423
  %v2425 = vadd.f32 %v2342, %v2343
  %2426 = vadd.xlane.f32.xlu0 %v2425
  %v2427 = vpop.xlane.xlu0 %2426
  %v2428 = vadd.f32 %v2344, %v2345
  %2429 = vadd.xlane.f32.xlu0 %v2428
  %v2430 = vpop.xlane.xlu0 %2429
  %v2431 = vadd.f32 %v2346, %v2347
  %2432 = vadd.xlane.f32.xlu0 %v2431
  %v2433 = vpop.xlane.xlu0 %2432
  %v2434 = vadd.f32 %v2348, %v2349
  %2435 = vadd.xlane.f32.xlu0 %v2434
  %v2436 = vpop.xlane.xlu0 %2435
  %v2437 = vadd.f32 %v2350, %v2351
  %2438 = vadd.xlane.f32.xlu0 %v2437
  %v2439 = vpop.xlane.xlu0 %2438
  %v2440 = vadd.f32 %v2352, %v2353
  %2441 = vadd.xlane.f32.xlu0 %v2440
  %v2442 = vpop.xlane.xlu0 %2441
  %v2443 = vadd.f32 %v2354, %v2355
  %2444 = vadd.xlane.f32.xlu0 %v2443
  %v2445 = vpop.xlane.xlu0 %2444
  %v2446 = vadd.f32 %v2356, %v2357
  %2447 = vadd.xlane.f32.xlu0 %v2446
  %v2448 = vpop.xlane.xlu0 %2447
  %v2449 = vadd.f32 %v2358, %v2359
  %2450 = vadd.xlane.f32.xlu0 %v2449
  %v2451 = vpop.xlane.xlu0 %2450
  %v2452 = vadd.f32 %v2360, %v2361
  %2453 = vadd.xlane.f32.xlu0 %v2452
  %v2454 = vpop.xlane.xlu0 %2453
  %v2455 = vadd.f32 %v2362, %v2363
  %2456 = vadd.xlane.f32.xlu0 %v2455
  %v2457 = vpop.xlane.xlu0 %2456
  %v2458 = vadd.f32 %v2364, %v2365
  %2459 = vadd.xlane.f32.xlu0 %v2458
  %v2460 = vpop.xlane.xlu0 %2459
  %v2461 = vadd.f32 %v2366, %v2367
  %2462 = vadd.xlane.f32.xlu0 %v2461
  %v2463 = vpop.xlane.xlu0 %2462
  %v2464 = vmax.f32 %v2370, 1.0
  %v2465 = vmax.f32 %v2373, 1.0
  %v2466 = vmax.f32 %v2376, 1.0
  %v2467 = vmax.f32 %v2379, 1.0
  %v2468 = vmax.f32 %v2382, 1.0
  %v2469 = vmax.f32 %v2385, 1.0
  %v2470 = vmax.f32 %v2388, 1.0
  %v2471 = vmax.f32 %v2391, 1.0
  %v2472 = vmax.f32 %v2394, 1.0
  %v2473 = vmax.f32 %v2397, 1.0
  %v2474 = vmax.f32 %v2400, 1.0
  %v2475 = vmax.f32 %v2403, 1.0
  %v2476 = vmax.f32 %v2406, 1.0
  %v2477 = vmax.f32 %v2409, 1.0
  %v2478 = vmax.f32 %v2412, 1.0
  %v2479 = vmax.f32 %v2415, 1.0
  %v2480 = vmax.f32 %v2418, 1.0
  %v2481 = vmax.f32 %v2421, 1.0
  %v2482 = vmax.f32 %v2424, 1.0
  %v2483 = vmax.f32 %v2427, 1.0
  %v2484 = vmax.f32 %v2430, 1.0
  %v2485 = vmax.f32 %v2433, 1.0
  %v2486 = vmax.f32 %v2436, 1.0
  %v2487 = vmax.f32 %v2439, 1.0
  %v2488 = vmax.f32 %v2442, 1.0
  %v2489 = vmax.f32 %v2445, 1.0
  %v2490 = vmax.f32 %v2448, 1.0
  %v2491 = vmax.f32 %v2451, 1.0
  %v2492 = vmax.f32 %v2454, 1.0
  %v2493 = vmax.f32 %v2457, 1.0
  %v2494 = vmax.f32 %v2460, 1.0
  %v2495 = vmax.f32 %v2463, 1.0
  %v2496 = vrcp.pop %v2464
  %v2497 = vmul.f32 %v2210, %v2496
  %v2498 = vrcp.pop %v2465
  %v2499 = vmul.f32 %v2213, %v2498
  %v2500 = vrcp.pop %v2466
  %v2501 = vmul.f32 %v2216, %v2500
  %v2502 = vrcp.pop %v2467
  %v2503 = vmul.f32 %v2219, %v2502
  %v2504 = vrcp.pop %v2468
  %v2505 = vmul.f32 %v2222, %v2504
  %v2506 = vrcp.pop %v2469
  %v2507 = vmul.f32 %v2225, %v2506
  %v2508 = vrcp.pop %v2470
  %v2509 = vmul.f32 %v2228, %v2508
  %v2510 = vrcp.pop %v2471
  %v2511 = vmul.f32 %v2231, %v2510
  %v2512 = vrcp.pop %v2472
  %v2513 = vmul.f32 %v2234, %v2512
  %v2514 = vrcp.pop %v2473
  %v2515 = vmul.f32 %v2237, %v2514
  %v2516 = vrcp.pop %v2474
  %v2517 = vmul.f32 %v2240, %v2516
  %v2518 = vrcp.pop %v2475
  %v2519 = vmul.f32 %v2243, %v2518
  %v2520 = vrcp.pop %v2476
  %v2521 = vmul.f32 %v2246, %v2520
  %v2522 = vrcp.pop %v2477
  %v2523 = vmul.f32 %v2249, %v2522
  %v2524 = vrcp.pop %v2478
  %v2525 = vmul.f32 %v2252, %v2524
  %v2526 = vrcp.pop %v2479
  %v2527 = vmul.f32 %v2255, %v2526
  %v2528 = vrcp.pop %v2480
  %v2529 = vmul.f32 %v2258, %v2528
  %v2530 = vrcp.pop %v2481
  %v2531 = vmul.f32 %v2261, %v2530
  %v2532 = vrcp.pop %v2482
  %v2533 = vmul.f32 %v2264, %v2532
  %v2534 = vrcp.pop %v2483
  %v2535 = vmul.f32 %v2267, %v2534
  %v2536 = vrcp.pop %v2484
  %v2537 = vmul.f32 %v2270, %v2536
  %v2538 = vrcp.pop %v2485
  %v2539 = vmul.f32 %v2273, %v2538
  %v2540 = vrcp.pop %v2486
  %v2541 = vmul.f32 %v2276, %v2540
  %v2542 = vrcp.pop %v2487
  %v2543 = vmul.f32 %v2279, %v2542
  %v2544 = vrcp.pop %v2488
  %v2545 = vmul.f32 %v2282, %v2544
  %v2546 = vrcp.pop %v2489
  %v2547 = vmul.f32 %v2285, %v2546
  %v2548 = vrcp.pop %v2490
  %v2549 = vmul.f32 %v2288, %v2548
  %v2550 = vrcp.pop %v2491
  %v2551 = vmul.f32 %v2291, %v2550
  %v2552 = vrcp.pop %v2492
  %v2553 = vmul.f32 %v2294, %v2552
  %v2554 = vrcp.pop %v2493
  %v2555 = vmul.f32 %v2297, %v2554
  %v2556 = vrcp.pop %v2494
  %v2557 = vmul.f32 %v2300, %v2556
  %v2558 = vrcp.pop %v2495
  %v2559 = vmul.f32 %v2303, %v2558
  %v2560 = vmul.f32 %v2497, -1.4285715
  %v2561 = vmul.f32 %v2499, -1.4285715
  %v2562 = vmul.f32 %v2501, -1.4285715
  %v2563 = vmul.f32 %v2503, -1.4285715
  %v2564 = vmul.f32 %v2505, -1.4285715
  %v2565 = vmul.f32 %v2507, -1.4285715
  %v2566 = vmul.f32 %v2509, -1.4285715
  %v2567 = vmul.f32 %v2511, -1.4285715
  %v2568 = vmul.f32 %v2513, -1.4285715
  %v2569 = vmul.f32 %v2515, -1.4285715
  %v2570 = vmul.f32 %v2517, -1.4285715
  %v2571 = vmul.f32 %v2519, -1.4285715
  %v2572 = vmul.f32 %v2521, -1.4285715
  %v2573 = vmul.f32 %v2523, -1.4285715
  %v2574 = vmul.f32 %v2525, -1.4285715
  %v2575 = vmul.f32 %v2527, -1.4285715
  %v2576 = vmul.f32 %v2529, -1.4285715
  %v2577 = vmul.f32 %v2531, -1.4285715
  %v2578 = vmul.f32 %v2533, -1.4285715
  %v2579 = vmul.f32 %v2535, -1.4285715
  %v2580 = vmul.f32 %v2537, -1.4285715
  %v2581 = vmul.f32 %v2539, -1.4285715
  %v2582 = vmul.f32 %v2541, -1.4285715
  %v2583 = vmul.f32 %v2543, -1.4285715
  %v2584 = vmul.f32 %v2545, -1.4285715
  %v2585 = vmul.f32 %v2547, -1.4285715
  %v2586 = vmul.f32 %v2549, -1.4285715
  %v2587 = vmul.f32 %v2551, -1.4285715
  %v2588 = vmul.f32 %v2553, -1.4285715
  %v2589 = vmul.f32 %v2555, -1.4285715
  %v2590 = vmul.f32 %v2557, -1.4285715
  %v2591 = vmul.f32 %v2559, -1.4285715
  %v2592 = vsel %vm1008, %v2560, 0.0
  %v2593 = vsel %vm1009, %v2561, 0.0
  %v2594 = vsel %vm1010, %v2562, 0.0
  %v2595 = vsel %vm1011, %v2563, 0.0
  %v2596 = vsel %vm1012, %v2564, 0.0
  %v2597 = vsel %vm1013, %v2565, 0.0
  %v2598 = vsel %vm1014, %v2566, 0.0
  %v2599 = vsel %vm1015, %v2567, 0.0
  %v2600 = vsel %vm1016, %v2568, 0.0
  %v2601 = vsel %vm1017, %v2569, 0.0
  %v2602 = vsel %vm1018, %v2570, 0.0
  %v2603 = vsel %vm1019, %v2571, 0.0
  %v2604 = vsel %vm1020, %v2572, 0.0
  %v2605 = vsel %vm1021, %v2573, 0.0
  %v2606 = vsel %vm1022, %v2574, 0.0
  %v2607 = vsel %vm1023, %v2575, 0.0
  %v2608 = vsel %vm1024, %v2576, 0.0
  %v2609 = vsel %vm1025, %v2577, 0.0
  %v2610 = vsel %vm1026, %v2578, 0.0
  %v2611 = vsel %vm1027, %v2579, 0.0
  %v2612 = vsel %vm1028, %v2580, 0.0
  %v2613 = vsel %vm1029, %v2581, 0.0
  %v2614 = vsel %vm1030, %v2582, 0.0
  %v2615 = vsel %vm1031, %v2583, 0.0
  %v2616 = vsel %vm1032, %v2584, 0.0
  %v2617 = vsel %vm1033, %v2585, 0.0
  %v2618 = vsel %vm1034, %v2586, 0.0
  %v2619 = vsel %vm1035, %v2587, 0.0
  %v2620 = vsel %vm1036, %v2588, 0.0
  %v2621 = vsel %vm1037, %v2589, 0.0
  %v2622 = vsel %vm1038, %v2590, 0.0
  %v2623 = vsel %vm1039, %v2591, 0.0
  %vm2624 = vcmask 7168
  %2625 = vst.msk [vmem:[%s6] sm:$0xff] %vm2624, %v2592
  %2626 = vst.msk [vmem:[%s6 + $0x8] sm:$0xff] %vm2624, %v2593
  %2627 = vst.msk [vmem:[%s6 + $0x10] sm:$0xff] %vm2624, %v2594
  %2628 = vst.msk [vmem:[%s6 + $0x18] sm:$0xff] %vm2624, %v2595
  %2629 = vst.msk [vmem:[%s6 + $0x20] sm:$0xff] %vm2624, %v2596
  %2630 = vst.msk [vmem:[%s6 + $0x28] sm:$0xff] %vm2624, %v2597
  %2631 = vst.msk [vmem:[%s6 + $0x30] sm:$0xff] %vm2624, %v2598
  %2632 = vst.msk [vmem:[%s6 + $0x38] sm:$0xff] %vm2624, %v2599
  %2633 = vst.msk [vmem:[%s6 + $0x40] sm:$0xff] %vm2624, %v2600
  %2634 = vst.msk [vmem:[%s6 + $0x48] sm:$0xff] %vm2624, %v2601
  %2635 = vst.msk [vmem:[%s6 + $0x50] sm:$0xff] %vm2624, %v2602
  %2636 = vst.msk [vmem:[%s6 + $0x58] sm:$0xff] %vm2624, %v2603
  %2637 = vst.msk [vmem:[%s6 + $0x60] sm:$0xff] %vm2624, %v2604
  %2638 = vst.msk [vmem:[%s6 + $0x68] sm:$0xff] %vm2624, %v2605
  %2639 = vst.msk [vmem:[%s6 + $0x70] sm:$0xff] %vm2624, %v2606
  %2640 = vst.msk [vmem:[%s6 + $0x78] sm:$0xff] %vm2624, %v2607
  %2641 = vst.msk [vmem:[%s6 + $0x80] sm:$0xff] %vm2624, %v2608
  %2642 = vst.msk [vmem:[%s6 + $0x88] sm:$0xff] %vm2624, %v2609
  %2643 = vst.msk [vmem:[%s6 + $0x90] sm:$0xff] %vm2624, %v2610
  %2644 = vst.msk [vmem:[%s6 + $0x98] sm:$0xff] %vm2624, %v2611
  %2645 = vst.msk [vmem:[%s6 + $0xa0] sm:$0xff] %vm2624, %v2612
  %2646 = vst.msk [vmem:[%s6 + $0xa8] sm:$0xff] %vm2624, %v2613
  %2647 = vst.msk [vmem:[%s6 + $0xb0] sm:$0xff] %vm2624, %v2614
  %2648 = vst.msk [vmem:[%s6 + $0xb8] sm:$0xff] %vm2624, %v2615
  %2649 = vst.msk [vmem:[%s6 + $0xc0] sm:$0xff] %vm2624, %v2616
  %2650 = vst.msk [vmem:[%s6 + $0xc8] sm:$0xff] %vm2624, %v2617
  %2651 = vst.msk [vmem:[%s6 + $0xd0] sm:$0xff] %vm2624, %v2618
  %2652 = vst.msk [vmem:[%s6 + $0xd8] sm:$0xff] %vm2624, %v2619
  %2653 = vst.msk [vmem:[%s6 + $0xe0] sm:$0xff] %vm2624, %v2620
  %2654 = vst.msk [vmem:[%s6 + $0xe8] sm:$0xff] %vm2624, %v2621
  %2655 = vst.msk [vmem:[%s6 + $0xf0] sm:$0xff] %vm2624, %v2622
  %2656 = vst.msk [vmem:[%s6 + $0xf8] sm:$0xff] %vm2624, %v2623
  // Predicated region
  $region26: #{tpu_custom_call.1} parent=0 // pred_check
    _
  $region27: #{tpu_custom_call.1} parent=0 // pred_check_branch
    %2658 = sbr.rel (0) target = $region29
  $region28: #{tpu_custom_call.1} parent=0 // pred_region
    _
  $region29: #{tpu_custom_call.1} parent=0 // pred_fallthru
    _
  // Predicated region
  $region30: #{tpu_custom_call.1} parent=0 // pred_check
    _
  $region31: #{tpu_custom_call.1} parent=0 // pred_check_branch
    %2660 = sbr.rel (0) target = $region33
  $region32: #{tpu_custom_call.1} parent=0 // pred_region
    _
  $region33: #{tpu_custom_call.1} parent=0 // pred_fallthru
    _

</llo_original>
